<compile_context>
chip_gen: v7x
topology: tpu7x:2x2x1
jax: 0.10.0
libtpu: 0.0.40
codegen_flags: <defaults>
</compile_context>

<pallas_src>
import functools

import jax
import jax.numpy as jnp
from jax.experimental import pallas as pl
from jax.experimental.pallas import tpu as pltpu


def _round_up(x: int, m: int) -> int:
    return ((x + m - 1) // m) * m


def _synthesis_kernel(x_ref, w_ref, b_ref, o_ref, *, kernel_size: int,
                      w_padded: int, tile: int, non_linearity: str):
    """One (batch, spatial-tile) grid step.

    x_ref: (C_in, TH)            activation tile + halo (flattened padded-spatial)
    w_ref: (K*K, C_out_p, C_in)  per-tap weight matrices (VMEM resident)
    b_ref: (C_out_p, 1)          bias column (f32)
    o_ref: (C_out_p, T)          output tile on the (H, W_pad) grid, flattened
    """
    K = kernel_size
    acc = jnp.zeros(o_ref.shape, dtype=jnp.float32)
    # K*K shifted matmuls: tap (kh, kw) reads the window starting at flat
    # offset kh*W_pad + kw.  Offsets are static -> cheap lane shifts (XLU).
    for kh in range(K):
        for kw in range(K):
            tap = kh * K + kw
            off = kh * w_padded + kw
            xs = x_ref[:, pl.ds(off, tile)]                       # (C_in, T)
            acc += jnp.dot(w_ref[tap], xs,
                           preferred_element_type=jnp.float32)    # (C_out_p, T)
    acc = acc + b_ref[...]                    # bias broadcasts over the lane dim
    if non_linearity == "relu":
        acc = jnp.maximum(acc, 0.0)
    # "identity": nothing to do (matches nn.Identity default)
    o_ref[...] = acc.astype(o_ref.dtype)


def synthesis_layer_forward(x, weight, bias, *, non_linearity: str = "identity",
                            compute_dtype=None, t_max: int = 4096,
                            vmem_budget_bytes: int = 24 * 1024 * 1024):
    """Forward pass of SynthesisLayer.

    Args:
      x:      (N, C_in, H, W) NCHW, like the PyTorch module.
      weight: (C_out, C_in, K, K)
      bias:   (C_out,)
      non_linearity: "identity" | "relu"
      compute_dtype: optional dtype for matmul operands (e.g. jnp.bfloat16 on
        v6e/v7x); accumulation is always f32.
      t_max: max lane tile (multiple of 128) for the flattened spatial axis.
    Returns:
      (N, C_out, H, W) in x.dtype.
    """
    N, C_in, H, W = x.shape
    C_out, _, K, K2 = weight.shape
    assert K == K2
    # TODO(synk): even kernel_size needs asymmetric replication padding to match
    # PyTorch; this module is used with odd kernels, so keep that restriction.
    assert K % 2 == 1, "even kernel_size not supported"

    out_dtype = jnp.dtype(x.dtype)
    cdt = jnp.dtype(compute_dtype) if compute_dtype is not None else out_dtype

    p = (K - 1) // 2
    H_pad, W_pad = H + 2 * p, W + 2 * p
    Q = H * W_pad                              # output length on the (H, W_pad) grid
    HALO = (K - 1) * W_pad + (K - 1)
    C_out_p = _round_up(C_out, 8)              # sublane-aligned output channels
    KK = K * K

    # ---- pick the spatial (lane) tile: multiple of 128, fits the VMEM budget ----
    T = max(128, min(_round_up(t_max, 128), _round_up(Q, 128)))
    while T > 256:
        TH = _round_up(T + HALO, 128)
        need = 2 * (C_in * TH * cdt.itemsize + C_out_p * T * out_dtype.itemsize)
        if need <= vmem_budget_bytes:
            break
        T -= 128
    TH = _round_up(T + HALO, 128)              # per-tile input window (incl. halo)
    nt = pl.cdiv(Q, T)
    L = (nt - 1) * T + TH                      # flat input length needed

    # ---- wrapper layout glue (no K^2 blow-up; only ~(1 + HALO/T)x copy) ----
    # ReplicationPad2d == edge padding.
    x_pad = jnp.pad(x, ((0, 0), (0, 0), (p, p), (p, p)), mode="edge")
    x_flat = x_pad.reshape(N, C_in, H_pad * W_pad)
    x_flat = jnp.pad(x_flat, ((0, 0), (0, 0), (0, L - H_pad * W_pad)))
    # Halo'd spatial tiles: tile t covers flat range [t*T, t*T + TH).
    x_tiles = jnp.stack([x_flat[:, :, t * T:t * T + TH] for t in range(nt)],
                        axis=1).astype(cdt)    # (N, nt, C_in, TH)

    # Per-tap weight matrices (K*K, C_out_p, C_in) and bias column (C_out_p, 1).
    w_taps = jnp.transpose(weight, (2, 3, 0, 1)).reshape(KK, C_out, C_in)
    w_taps = jnp.pad(w_taps, ((0, 0), (0, C_out_p - C_out), (0, 0))).astype(cdt)
    b_col = jnp.pad(bias, (0, C_out_p - C_out)).reshape(C_out_p, 1).astype(jnp.float32)

    kernel = functools.partial(_synthesis_kernel, kernel_size=K, w_padded=W_pad,
                               tile=T, non_linearity=non_linearity)

    # Explicit VMEM limit (double-buffered in/out blocks + resident weights),
    # with generous headroom but well under v7x's 64 MiB physical VMEM.
    vmem_need = (2 * C_in * TH * cdt.itemsize
                 + 2 * C_out_p * T * out_dtype.itemsize
                 + KK * C_out_p * max(C_in, 8) * cdt.itemsize
                 + C_out_p * 128 * 4)
    vmem_limit = int(min(max(2 * vmem_need + (4 << 20), 8 << 20), 48 << 20))

    cost = pl.CostEstimate(
        flops=2 * N * C_out * C_in * KK * H * W,
        transcendentals=0,
        bytes_accessed=int(x_tiles.size * cdt.itemsize
                           + w_taps.size * cdt.itemsize
                           + b_col.size * 4
                           + N * C_out_p * nt * T * out_dtype.itemsize),
    )

    out_flat = pl.pallas_call(
        kernel,
        out_shape=jax.ShapeDtypeStruct((N, C_out_p, nt * T), out_dtype),
        grid=(N, nt),
        in_specs=[
            # Activation tile + halo: lane-dense, full last-two dims per block.
            pl.BlockSpec((pl.Squeezed(), pl.Squeezed(), C_in, TH),
                         lambda n, t: (n, t, 0, 0)),
            # Weights / bias: constant index_map -> stay resident in VMEM.
            pl.BlockSpec((KK, C_out_p, C_in), lambda n, t: (0, 0, 0)),
            pl.BlockSpec((C_out_p, 1), lambda n, t: (0, 0)),
        ],
        out_specs=pl.BlockSpec((pl.Squeezed(), C_out_p, T),
                               lambda n, t: (n, 0, t)),
        compiler_params=pltpu.CompilerParams(
            dimension_semantics=("parallel", "parallel"),
            vmem_limit_bytes=vmem_limit,
        ),
        cost_estimate=cost,
    )(x_tiles, w_taps, b_col)

    # Crop padded channels, flat padding, and the padded-width columns.
    out = out_flat[:, :C_out, :Q].reshape(N, C_out, H, W_pad)[:, :, :, :W]
    return out


def init_synthesis_params(key, input_ft, output_ft, kernel_size):
    """Mirror the PyTorch module's __init__: Conv2d default init (uniform with
    bound 1/sqrt(fan_in)), then weight /= output_ft**2 and bias *= 0."""
    fan_in = input_ft * kernel_size * kernel_size
    bound = 1.0 / jnp.sqrt(jnp.float32(fan_in))
    weight = jax.random.uniform(
        key, (output_ft, input_ft, kernel_size, kernel_size),
        minval=-bound, maxval=bound, dtype=jnp.float32,
    ) / (output_ft ** 2)
    bias = jnp.zeros((output_ft,), dtype=jnp.float32)
    return weight, bias


def _reference_forward(x, weight, bias, non_linearity="identity"):
    """Pure-JAX reference (lax conv) for correctness checking."""
    K = weight.shape[-1]
    p = (K - 1) // 2
    x_pad = jnp.pad(x, ((0, 0), (0, 0), (p, p), (p, p)), mode="edge")
    out = jax.lax.conv_general_dilated(
        x_pad, weight, window_strides=(1, 1), padding="VALID",
        dimension_numbers=("NCHW", "OIHW", "NCHW"),
        precision=jax.lax.Precision.HIGHEST,
    ) + bias.reshape(1, -1, 1, 1)
    if non_linearity == "relu":
        out = jnp.maximum(out, 0.0)
    return out


if __name__ == "__main__":
    key = jax.random.PRNGKey(0)
    k_w, k_x, k_w2, k_x2 = jax.random.split(key, 4)

    # --- Test 1: identity non-linearity, f32, single spatial tile ---
    N, C_in, C_out, H, W, K = 2, 4, 4, 16, 16, 3
    weight, bias = init_synthesis_params(k_w, C_in, C_out, K)
    x = jax.random.normal(k_x, (N, C_in, H, W), dtype=jnp.float32)

    out = jax.block_until_ready(
        synthesis_layer_forward(x, weight, bias, non_linearity="identity"))
    ref = _reference_forward(x, weight, bias, "identity")
    assert out.shape == (N, C_out, H, W)
    assert jnp.allclose(out, ref, rtol=1e-4, atol=1e-5), "mismatch (identity, f32)"

    # --- Test 2: relu, multi-tile path (small t_max), non-multiple-of-8 channels ---
    N2, C2_in, C2_out, H2, W2 = 1, 5, 3, 40, 40
    w2, b2 = init_synthesis_params(k_w2, C2_in, C2_out, K)
    b2 = b2 + 0.01
    x2 = jax.random.normal(k_x2, (N2, C2_in, H2, W2), dtype=jnp.float32)

    out2 = jax.block_until_ready(
        synthesis_layer_forward(x2, w2, b2, non_linearity="relu", t_max=512))
    ref2 = _reference_forward(x2, w2, b2, "relu")
    assert out2.shape == (N2, C2_out, H2, W2)
    assert jnp.allclose(out2, ref2, rtol=1e-4, atol=1e-5), "mismatch (relu, tiled)"

    # --- Test 3: bf16 operands (v6e/v7x MXU path), f32 accumulation ---
    out3 = jax.block_until_ready(
        synthesis_layer_forward(x, weight, bias, non_linearity="identity",
                                compute_dtype=jnp.bfloat16))
    assert jnp.allclose(out3, ref, rtol=5e-2, atol=1e-2), "mismatch (bf16 compute)"

    print("KERNEL_OK")
</pallas_src>

<mosaic_0001>
module attributes {stable_mosaic.version = 11 : i64} {
  func.func @_synthesis_kernel(%arg0: i32, %arg1: i32, %arg2: memref<1x1x4x512xf32, #tpu.memory_space<vmem>>, %arg3: memref<9x8x4xf32, #tpu.memory_space<vmem>>, %arg4: memref<8x1xf32, #tpu.memory_space<vmem>>, %arg5: memref<1x8x384xf32, #tpu.memory_space<vmem>>) attributes {dimension_semantics = [#tpu.dimension_semantics<parallel>, #tpu.dimension_semantics<parallel>], iteration_bounds = array<i64: 2, 1>, scalar_prefetch = 0 : i64, scratch_operands = 0 : i64, tpu.core_type = #tpu.core_type<tc>, window_params = [{transform_indices = @transform_0, window_bounds = array<i64: 1, 1, 4, 512>}, {pipeline_mode = #tpu.pipeline_mode<synchronous>, transform_indices = @transform_1, window_bounds = array<i64: 9, 8, 4>}, {pipeline_mode = #tpu.pipeline_mode<synchronous>, transform_indices = @transform_2, window_bounds = array<i64: 8, 1>}, {transform_indices = @transform_3, window_bounds = array<i64: 1, 8, 384>}]} {
    %cst = arith.constant 0.000000e+00 : f32
    %0 = vector.broadcast %cst : f32 to vector<8x384xf32>
    %c0 = arith.constant 0 : index
    %c0_0 = arith.constant 0 : index
    %c0_1 = arith.constant 0 : index
    %c0_2 = arith.constant 0 : index
    %1 = vector.load %arg2[%c0, %c0_0, %c0_1, %c0_2] : memref<1x1x4x512xf32, #tpu.memory_space<vmem>>, vector<1x1x4x384xf32>
    %2 = vector.shape_cast %1 : vector<1x1x4x384xf32> to vector<4x384xf32>
    %c0_3 = arith.constant 0 : index
    %c0_4 = arith.constant 0 : index
    %c0_5 = arith.constant 0 : index
    %3 = vector.load %arg3[%c0_3, %c0_4, %c0_5] : memref<9x8x4xf32, #tpu.memory_space<vmem>>, vector<1x8x4xf32>
    %4 = vector.shape_cast %3 : vector<1x8x4xf32> to vector<8x4xf32>
    %cst_6 = arith.constant dense<0.000000e+00> : vector<8x384xf32>
    %5 = tpu.matmul %4, %2, %cst_6 {dimension_numbers = #tpu.dot_dimension_numbers<[1], [0], [0], [1], [0, 0, 1, 1], [], []>} : vector<8x4xf32>, vector<4x384xf32>, vector<8x384xf32> -> vector<8x384xf32>
    %6 = arith.addf %0, %5 : vector<8x384xf32>
    %c0_7 = arith.constant 0 : index
    %c0_8 = arith.constant 0 : index
    %c0_9 = arith.constant 0 : index
    %c1 = arith.constant 1 : index
    %7 = vector.load %arg2[%c0_7, %c0_8, %c0_9, %c1] : memref<1x1x4x512xf32, #tpu.memory_space<vmem>>, vector<1x1x4x384xf32>
    %8 = vector.shape_cast %7 : vector<1x1x4x384xf32> to vector<4x384xf32>
    %c1_10 = arith.constant 1 : index
    %c0_11 = arith.constant 0 : index
    %c0_12 = arith.constant 0 : index
    %9 = vector.load %arg3[%c1_10, %c0_11, %c0_12] : memref<9x8x4xf32, #tpu.memory_space<vmem>>, vector<1x8x4xf32>
    %10 = vector.shape_cast %9 : vector<1x8x4xf32> to vector<8x4xf32>
    %cst_13 = arith.constant dense<0.000000e+00> : vector<8x384xf32>
    %11 = tpu.matmul %10, %8, %cst_13 {dimension_numbers = #tpu.dot_dimension_numbers<[1], [0], [0], [1], [0, 0, 1, 1], [], []>} : vector<8x4xf32>, vector<4x384xf32>, vector<8x384xf32> -> vector<8x384xf32>
    %12 = arith.addf %6, %11 : vector<8x384xf32>
    %c0_14 = arith.constant 0 : index
    %c0_15 = arith.constant 0 : index
    %c0_16 = arith.constant 0 : index
    %c2 = arith.constant 2 : index
    %13 = vector.load %arg2[%c0_14, %c0_15, %c0_16, %c2] : memref<1x1x4x512xf32, #tpu.memory_space<vmem>>, vector<1x1x4x384xf32>
    %14 = vector.shape_cast %13 : vector<1x1x4x384xf32> to vector<4x384xf32>
    %c2_17 = arith.constant 2 : index
    %c0_18 = arith.constant 0 : index
    %c0_19 = arith.constant 0 : index
    %15 = vector.load %arg3[%c2_17, %c0_18, %c0_19] : memref<9x8x4xf32, #tpu.memory_space<vmem>>, vector<1x8x4xf32>
    %16 = vector.shape_cast %15 : vector<1x8x4xf32> to vector<8x4xf32>
    %cst_20 = arith.constant dense<0.000000e+00> : vector<8x384xf32>
    %17 = tpu.matmul %16, %14, %cst_20 {dimension_numbers = #tpu.dot_dimension_numbers<[1], [0], [0], [1], [0, 0, 1, 1], [], []>} : vector<8x4xf32>, vector<4x384xf32>, vector<8x384xf32> -> vector<8x384xf32>
    %18 = arith.addf %12, %17 : vector<8x384xf32>
    %c0_21 = arith.constant 0 : index
    %c0_22 = arith.constant 0 : index
    %c0_23 = arith.constant 0 : index
    %c18 = arith.constant 18 : index
    %19 = vector.load %arg2[%c0_21, %c0_22, %c0_23, %c18] : memref<1x1x4x512xf32, #tpu.memory_space<vmem>>, vector<1x1x4x384xf32>
    %20 = vector.shape_cast %19 : vector<1x1x4x384xf32> to vector<4x384xf32>
    %c3 = arith.constant 3 : index
    %c0_24 = arith.constant 0 : index
    %c0_25 = arith.constant 0 : index
    %21 = vector.load %arg3[%c3, %c0_24, %c0_25] : memref<9x8x4xf32, #tpu.memory_space<vmem>>, vector<1x8x4xf32>
    %22 = vector.shape_cast %21 : vector<1x8x4xf32> to vector<8x4xf32>
    %cst_26 = arith.constant dense<0.000000e+00> : vector<8x384xf32>
    %23 = tpu.matmul %22, %20, %cst_26 {dimension_numbers = #tpu.dot_dimension_numbers<[1], [0], [0], [1], [0, 0, 1, 1], [], []>} : vector<8x4xf32>, vector<4x384xf32>, vector<8x384xf32> -> vector<8x384xf32>
    %24 = arith.addf %18, %23 : vector<8x384xf32>
    %c0_27 = arith.constant 0 : index
    %c0_28 = arith.constant 0 : index
    %c0_29 = arith.constant 0 : index
    %c19 = arith.constant 19 : index
    %25 = vector.load %arg2[%c0_27, %c0_28, %c0_29, %c19] : memref<1x1x4x512xf32, #tpu.memory_space<vmem>>, vector<1x1x4x384xf32>
    %26 = vector.shape_cast %25 : vector<1x1x4x384xf32> to vector<4x384xf32>
    %c4 = arith.constant 4 : index
    %c0_30 = arith.constant 0 : index
    %c0_31 = arith.constant 0 : index
    %27 = vector.load %arg3[%c4, %c0_30, %c0_31] : memref<9x8x4xf32, #tpu.memory_space<vmem>>, vector<1x8x4xf32>
    %28 = vector.shape_cast %27 : vector<1x8x4xf32> to vector<8x4xf32>
    %cst_32 = arith.constant dense<0.000000e+00> : vector<8x384xf32>
    %29 = tpu.matmul %28, %26, %cst_32 {dimension_numbers = #tpu.dot_dimension_numbers<[1], [0], [0], [1], [0, 0, 1, 1], [], []>} : vector<8x4xf32>, vector<4x384xf32>, vector<8x384xf32> -> vector<8x384xf32>
    %30 = arith.addf %24, %29 : vector<8x384xf32>
    %c0_33 = arith.constant 0 : index
    %c0_34 = arith.constant 0 : index
    %c0_35 = arith.constant 0 : index
    %c20 = arith.constant 20 : index
    %31 = vector.load %arg2[%c0_33, %c0_34, %c0_35, %c20] : memref<1x1x4x512xf32, #tpu.memory_space<vmem>>, vector<1x1x4x384xf32>
    %32 = vector.shape_cast %31 : vector<1x1x4x384xf32> to vector<4x384xf32>
    %c5 = arith.constant 5 : index
    %c0_36 = arith.constant 0 : index
    %c0_37 = arith.constant 0 : index
    %33 = vector.load %arg3[%c5, %c0_36, %c0_37] : memref<9x8x4xf32, #tpu.memory_space<vmem>>, vector<1x8x4xf32>
    %34 = vector.shape_cast %33 : vector<1x8x4xf32> to vector<8x4xf32>
    %cst_38 = arith.constant dense<0.000000e+00> : vector<8x384xf32>
    %35 = tpu.matmul %34, %32, %cst_38 {dimension_numbers = #tpu.dot_dimension_numbers<[1], [0], [0], [1], [0, 0, 1, 1], [], []>} : vector<8x4xf32>, vector<4x384xf32>, vector<8x384xf32> -> vector<8x384xf32>
    %36 = arith.addf %30, %35 : vector<8x384xf32>
    %c0_39 = arith.constant 0 : index
    %c0_40 = arith.constant 0 : index
    %c0_41 = arith.constant 0 : index
    %c36 = arith.constant 36 : index
    %37 = vector.load %arg2[%c0_39, %c0_40, %c0_41, %c36] : memref<1x1x4x512xf32, #tpu.memory_space<vmem>>, vector<1x1x4x384xf32>
    %38 = vector.shape_cast %37 : vector<1x1x4x384xf32> to vector<4x384xf32>
    %c6 = arith.constant 6 : index
    %c0_42 = arith.constant 0 : index
    %c0_43 = arith.constant 0 : index
    %39 = vector.load %arg3[%c6, %c0_42, %c0_43] : memref<9x8x4xf32, #tpu.memory_space<vmem>>, vector<1x8x4xf32>
    %40 = vector.shape_cast %39 : vector<1x8x4xf32> to vector<8x4xf32>
    %cst_44 = arith.constant dense<0.000000e+00> : vector<8x384xf32>
    %41 = tpu.matmul %40, %38, %cst_44 {dimension_numbers = #tpu.dot_dimension_numbers<[1], [0], [0], [1], [0, 0, 1, 1], [], []>} : vector<8x4xf32>, vector<4x384xf32>, vector<8x384xf32> -> vector<8x384xf32>
    %42 = arith.addf %36, %41 : vector<8x384xf32>
    %c0_45 = arith.constant 0 : index
    %c0_46 = arith.constant 0 : index
    %c0_47 = arith.constant 0 : index
    %c37 = arith.constant 37 : index
    %43 = vector.load %arg2[%c0_45, %c0_46, %c0_47, %c37] : memref<1x1x4x512xf32, #tpu.memory_space<vmem>>, vector<1x1x4x384xf32>
    %44 = vector.shape_cast %43 : vector<1x1x4x384xf32> to vector<4x384xf32>
    %c7 = arith.constant 7 : index
    %c0_48 = arith.constant 0 : index
    %c0_49 = arith.constant 0 : index
    %45 = vector.load %arg3[%c7, %c0_48, %c0_49] : memref<9x8x4xf32, #tpu.memory_space<vmem>>, vector<1x8x4xf32>
    %46 = vector.shape_cast %45 : vector<1x8x4xf32> to vector<8x4xf32>
    %cst_50 = arith.constant dense<0.000000e+00> : vector<8x384xf32>
    %47 = tpu.matmul %46, %44, %cst_50 {dimension_numbers = #tpu.dot_dimension_numbers<[1], [0], [0], [1], [0, 0, 1, 1], [], []>} : vector<8x4xf32>, vector<4x384xf32>, vector<8x384xf32> -> vector<8x384xf32>
    %48 = arith.addf %42, %47 : vector<8x384xf32>
    %c0_51 = arith.constant 0 : index
    %c0_52 = arith.constant 0 : index
    %c0_53 = arith.constant 0 : index
    %c38 = arith.constant 38 : index
    %49 = vector.load %arg2[%c0_51, %c0_52, %c0_53, %c38] : memref<1x1x4x512xf32, #tpu.memory_space<vmem>>, vector<1x1x4x384xf32>
    %50 = vector.shape_cast %49 : vector<1x1x4x384xf32> to vector<4x384xf32>
    %c8 = arith.constant 8 : index
    %c0_54 = arith.constant 0 : index
    %c0_55 = arith.constant 0 : index
    %51 = vector.load %arg3[%c8, %c0_54, %c0_55] : memref<9x8x4xf32, #tpu.memory_space<vmem>>, vector<1x8x4xf32>
    %52 = vector.shape_cast %51 : vector<1x8x4xf32> to vector<8x4xf32>
    %cst_56 = arith.constant dense<0.000000e+00> : vector<8x384xf32>
    %53 = tpu.matmul %52, %50, %cst_56 {dimension_numbers = #tpu.dot_dimension_numbers<[1], [0], [0], [1], [0, 0, 1, 1], [], []>} : vector<8x4xf32>, vector<4x384xf32>, vector<8x384xf32> -> vector<8x384xf32>
    %54 = arith.addf %48, %53 : vector<8x384xf32>
    %c0_57 = arith.constant 0 : index
    %c0_58 = arith.constant 0 : index
    %55 = vector.load %arg4[%c0_57, %c0_58] : memref<8x1xf32, #tpu.memory_space<vmem>>, vector<8x1xf32>
    %56 = vector.broadcast %55 : vector<8x1xf32> to vector<8x384xf32>
    %57 = arith.addf %54, %56 : vector<8x384xf32>
    %c0_59 = arith.constant 0 : index
    %c0_60 = arith.constant 0 : index
    %c0_61 = arith.constant 0 : index
    %58 = vector.load %arg5[%c0_59, %c0_60, %c0_61] : memref<1x8x384xf32, #tpu.memory_space<vmem>>, vector<1x8x384xf32>
    %59 = vector.shape_cast %58 : vector<1x8x384xf32> to vector<8x384xf32>
    %60 = vector.shape_cast %57 : vector<8x384xf32> to vector<1x8x384xf32>
    tpu.vector_store %arg5[%c0_59, %c0_60, %c0_61], %60 {strides = array<i32>} : memref<1x8x384xf32, #tpu.memory_space<vmem>>, vector<1x8x384xf32>,
    return
  }
  func.func @transform_0(%arg0: i32, %arg1: i32) -> (i32, i32, i32, i32) {
    %c0_i32 = arith.constant 0 : i32
    %c0_i32_0 = arith.constant 0 : i32
    %c0_i32_1 = arith.constant 0 : i32
    return %arg0, %arg1, %c0_i32, %c0_i32_0 : i32, i32, i32, i32
  }
  func.func @transform_1(%arg0: i32, %arg1: i32) -> (i32, i32, i32) {
    %c0_i32 = arith.constant 0 : i32
    %c0_i32_0 = arith.constant 0 : i32
    %c0_i32_1 = arith.constant 0 : i32
    %c0_i32_2 = arith.constant 0 : i32
    return %c0_i32, %c0_i32_0, %c0_i32_1 : i32, i32, i32
  }
  func.func @transform_2(%arg0: i32, %arg1: i32) -> (i32, i32) {
    %c0_i32 = arith.constant 0 : i32
    %c0_i32_0 = arith.constant 0 : i32
    %c0_i32_1 = arith.constant 0 : i32
    return %c0_i32, %c0_i32_0 : i32, i32
  }
  func.func @transform_3(%arg0: i32, %arg1: i32) -> (i32, i32, i32) {
    %c0_i32 = arith.constant 0 : i32
    %c0_i32_0 = arith.constant 0 : i32
    return %arg0, %c0_i32, %arg1 : i32, i32, i32
  }
}

</mosaic_0001>

<llo_original>
// kernel: tpu_custom_call.1
$region0: #{tpu_custom_call.1}
  #allocation0 [shape = 'u32[]', space=smem, size = 0x4, offset = 0x4, fixed_abs, tag = 'smem constant byte address 0x4 - core index']
  #allocation1 [shape = 'u32[144,128]{1,0:T(1,128)}', space=vmem, size = 0x12000, scoped, tag = 'internal scratch']
  %s0 = inlined_call_operand.vmem [shape: f32[2,1,4,512], index: 0, kind: input, shape index: {}]
  %s1 = inlined_call_operand.vmem [shape: f32[9,8,4], index: 1, kind: input, shape index: {}]
  %s2 = inlined_call_operand.vmem [shape: f32[8,1], index: 2, kind: input, shape index: {}]
  %s3 = inlined_call_operand.hbm [shape: f32[2,8,384], index: 3, kind: output, shape index: {}]
  %s4 = sld [smem:[#allocation0]]
  $region45: #{tpu_custom_call.1} parent=0
    _
  %s6 = ssub.s32 1, %s4
  %s7 = scalar_select 0, %s6, %s4
  $region1: #{tpu_custom_call.1} parent=0
    #allocation2 [shape = 'u8[24576]{0}', space=vmem, size = 0x6000, scoped, tag = 'output window, operand 0']
    #allocation3 [shape = 's32[2]{0}', space=sflag, size = 0x8, scoped, tag = 'scoped memory for tpu_custom_call.1']
    %8 = vsyncpa [#allocation3], 0
    %s9 = scalar_lea.sflag [#allocation3], 1
    %10 = vsyncpa %s9, 0
    loop: start=0, step=1, limit=4
    $region2: #{tpu_custom_call.1} parent=1 // loop_pre_header
      _
    $region3: #{tpu_custom_call.1} parent=1 // loop_header
      %s12 = sphi 0, %s16
      %p13 = scmp.ge.s32.totalorder %s12, 4
      %s19 = sphi 0, %s31
      %s20 = sphi 0, %s27
      %s21 = sphi 0, %s19
      %s22 = sphi 0, %s20
      %s23 = sphi 0, %s21
      %s24 = sphi 0, %s22
      %s36 = sphi 0, %s38
      %s39 = sphi 0, %s36
      %s40 = sphi 0, %s39
      %s56 = sphi 0, %s40
      %s60 = sphi 0, %s60
      %s62 = sphi 0, %s60
      %s63 = sphi 0, %s62
      %s77 = sphi 0, %s63
      %s81 = sphi 0, %s81
      %s83 = sphi 0, %s81
      %s84 = sphi 0, %s83
      %s98 = sphi 0, %s84
      %s106 = sphi 0, %s108
      %s109 = sphi 0, %s106
      %s110 = sphi 0, %s109
      %s126 = sphi 0, %s110
    $region4: #{tpu_custom_call.1} parent=1 // loop_header_branch
      %15 = sbr.rel (%p13) target = $region8
    $region5: #{tpu_custom_call.1} parent=1 // loop_body
      %s17 = ssub.s32 %s12, 1
      %s18 = ssub.s32 %s12, 2
      %s25 = sadd.s32 1, %s20
      %p26 = scmp.ge.s32.totalorder %s25, 1
      %s27 = scalar_select %p26, 0, %s25
      %s28 = sadd.s32 1, %s19
      %s29 = scalar_select %p26, %s28, %s19
      %p30 = scmp.ge.s32.totalorder %s29, 2
      %s31 = scalar_select %p30, 0, %s29
      %s32 = ssub.s32 %s19, %s31
      %s33 = ssub.s32 %s20, %s27
      %s34 = sor.u32 %s32, %s33
      %p35 = scmp.eq.s32.totalorder %s34, 0
      %s37 = sadd.s32 %s36, 1
      %s38 = scalar_select %p35, %s36, %s37
      %p41 = pneg %p35
      %p42 = scmp.eq.s32.totalorder %s12, 1
      %p43 = por %p41, %p42
      %p44 = scmp.ne.s32.totalorder %s36, %s39
      %p45 = scmp.eq.s32.totalorder %s12, 0
      %p46 = por %p44, %p45
      %p47 = scmp.ne.s32.totalorder %s36, %s39
      %p48 = scmp.eq.s32.totalorder %s17, 1
      %p49 = por %p47, %p48
      %p50 = scmp.ne.s32.totalorder %s39, %s40
      %p51 = scmp.eq.s32.totalorder %s17, 0
      %p52 = por %p50, %p51
      %p53 = scmp.ne.s32.totalorder %s39, %s40
      %p54 = scmp.eq.s32.totalorder %s18, 1
      %p55 = por %p53, %p54
      %p57 = scmp.ne.s32.totalorder %s40, %s56
      %p58 = scmp.eq.s32.totalorder %s18, 0
      %p59 = por %p57, %p58
      %s61 = sadd.s32 %s60, 1
      %p64 = scmp.eq.s32.totalorder %s12, 1
      %p65 = scmp.ne.s32.totalorder %s60, %s62
      %p66 = scmp.eq.s32.totalorder %s12, 0
      %p67 = por %p65, %p66
      %p68 = scmp.ne.s32.totalorder %s60, %s62
      %p69 = scmp.eq.s32.totalorder %s17, 1
      %p70 = por %p68, %p69
      %p71 = scmp.ne.s32.totalorder %s62, %s63
      %p72 = scmp.eq.s32.totalorder %s17, 0
      %p73 = por %p71, %p72
      %p74 = scmp.ne.s32.totalorder %s62, %s63
      %p75 = scmp.eq.s32.totalorder %s18, 1
      %p76 = por %p74, %p75
      %p78 = scmp.ne.s32.totalorder %s63, %s77
      %p79 = scmp.eq.s32.totalorder %s18, 0
      %p80 = por %p78, %p79
      %s82 = sadd.s32 %s81, 1
      %p85 = scmp.eq.s32.totalorder %s12, 1
      %p86 = scmp.ne.s32.totalorder %s81, %s83
      %p87 = scmp.eq.s32.totalorder %s12, 0
      %p88 = por %p86, %p87
      %p89 = scmp.ne.s32.totalorder %s81, %s83
      %p90 = scmp.eq.s32.totalorder %s17, 1
      %p91 = por %p89, %p90
      %p92 = scmp.ne.s32.totalorder %s83, %s84
      %p93 = scmp.eq.s32.totalorder %s17, 0
      %p94 = por %p92, %p93
      %p95 = scmp.ne.s32.totalorder %s83, %s84
      %p96 = scmp.eq.s32.totalorder %s18, 1
      %p97 = por %p95, %p96
      %p99 = scmp.ne.s32.totalorder %s84, %s98
      %p100 = scmp.eq.s32.totalorder %s18, 0
      %p101 = por %p99, %p100
      %s102 = ssub.s32 %s19, %s31
      %s103 = ssub.s32 %s20, %s27
      %s104 = sor.u32 %s102, %s103
      %p105 = scmp.eq.s32.totalorder %s104, 0
      %s107 = sadd.s32 %s106, 1
      %s108 = scalar_select %p105, %s106, %s107
      %p111 = pneg %p105
      %p112 = scmp.eq.s32.totalorder %s12, 1
      %p113 = por %p111, %p112
      %p114 = scmp.ne.s32.totalorder %s106, %s109
      %p115 = scmp.eq.s32.totalorder %s12, 0
      %p116 = por %p114, %p115
      %p117 = scmp.ne.s32.totalorder %s106, %s109
      %p118 = scmp.eq.s32.totalorder %s17, 1
      %p119 = por %p117, %p118
      %p120 = scmp.ne.s32.totalorder %s109, %s110
      %p121 = scmp.eq.s32.totalorder %s17, 0
      %p122 = por %p120, %p121
      %p123 = scmp.ne.s32.totalorder %s109, %s110
      %p124 = scmp.eq.s32.totalorder %s18, 1
      %p125 = por %p123, %p124
      %p127 = scmp.ne.s32.totalorder %s110, %s126
      %p128 = scmp.eq.s32.totalorder %s18, 0
      %p129 = por %p127, %p128
      %p130 = scmp.le.s32.totalorder 1, %s12
      %p131 = scmp.lt.s32.totalorder %s12, 3
      %p132 = pnand %p130, %p131
      %p133 = pneg %p132
      // Predicated region
      $region9: #{tpu_custom_call.1} parent=5 // pred_check
        _
      $region10: #{tpu_custom_call.1} parent=5 // pred_check_branch
        %135 = sbr.rel (%p132) target = $region12
      $region11: #{tpu_custom_call.1} parent=5 // pred_region
        %s136 = ssub.s32 %s12, 1
        // Predicated region
        $region13: #{tpu_custom_call.1} parent=11 // pred_check
          %p137 = pneg %p73
        $region14: #{tpu_custom_call.1} parent=11 // pred_check_branch
          %139 = sbr.rel (%p137) target = $region16
        $region15: #{tpu_custom_call.1} parent=11 // pred_region
          _
        $region16: #{tpu_custom_call.1} parent=11 // pred_fallthru
          _
        // Predicated region
        $region17: #{tpu_custom_call.1} parent=11 // pred_check
          %p140 = pneg %p94
        $region18: #{tpu_custom_call.1} parent=11 // pred_check_branch
          %142 = sbr.rel (%p140) target = $region20
        $region19: #{tpu_custom_call.1} parent=11 // pred_region
          _
        $region20: #{tpu_custom_call.1} parent=11 // pred_fallthru
          _
      $region12: #{tpu_custom_call.1} parent=5 // pred_fallthru
        _
      %p143 = scmp.lt.s32.totalorder %s12, 2
      // Predicated region
      $region21: #{tpu_custom_call.1} parent=5 // pred_check
        %p144 = pneg %p143
      $region22: #{tpu_custom_call.1} parent=5 // pred_check_branch
        %146 = sbr.rel (%p144) target = $region24
      $region23: #{tpu_custom_call.1} parent=5 // pred_region
        // Predicated region
        $region25: #{tpu_custom_call.1} parent=23 // pred_check
          %p147 = pneg %p46
        $region26: #{tpu_custom_call.1} parent=23 // pred_check_branch
          %149 = sbr.rel (%p147) target = $region28
        $region27: #{tpu_custom_call.1} parent=23 // pred_region
          %p150 = scmp.lt.s32.totalorder %s19, 1
          %s151 = scalar_select %p150, %s19, 1
          %p152 = scmp.lt.s32.totalorder %s20, 0
          %s153 = scalar_select %p152, %s20, 0
          %s154 = smul.addr %s153, 4
          %s155 = smul.addr %s151, 4
          %s156 = sadd.s32 %s154, %s155
          %s157 = smul.addr %s156, 4
          %s158 = scalar_lea.vmem %s0, %s157
        $region28: #{tpu_custom_call.1} parent=23 // pred_fallthru
          _
      $region24: #{tpu_custom_call.1} parent=5 // pred_fallthru
        _
      %p159 = scmp.le.s32.totalorder 1, %s12
      %p160 = scmp.lt.s32.totalorder %s12, 3
      %p161 = pnand %p159, %p160
      %p162 = pneg %p161
      // Predicated region
      $region29: #{tpu_custom_call.1} parent=5 // pred_check
        _
      $region30: #{tpu_custom_call.1} parent=5 // pred_check_branch
        %164 = sbr.rel (%p161) target = $region32
      $region31: #{tpu_custom_call.1} parent=5 // pred_region
        %s165 = ssub.s32 %s12, 1
        %p166 = scmp.lt.s32.totalorder %s21, 1
        %s167 = scalar_select %p166, %s21, 1
        %p168 = scmp.lt.s32.totalorder %s22, 0
        %s169 = scalar_select %p168, %s22, 0
        %s170 = smul.addr %s169, 4
        %s171 = smul.addr %s167, 4
        %s172 = sadd.s32 %s170, %s171
        %s173 = smul.addr %s172, 4
        %s174 = scalar_lea.vmem %s0, %s173
        %p175 = pneg %p52
        %p176 = pneg %p49
        %p177 = pneg %p73
        %p178 = pneg %p70
        %p179 = pneg %p94
        %p180 = pneg %p91
        %p181 = pneg %p122
        %p182 = pneg %p119
        %s183 = sand.u32 %s109, 1
        %s184 = scalar_lea.sflag [#allocation3], %s183
        %s185 = sand.u32 %s109, 1
        %s186 = smul.addr %s185, 24
        %s187 = scalar_lea.vmem [#allocation2], %s186
        %p188 = scmp.lt.s32.totalorder %s21, 1
        %s189 = scalar_select %p188, %s21, 1
        %p190 = scmp.lt.s32.totalorder %s22, 0
        %s191 = scalar_select %p190, %s22, 0
        %s192 = smul.addr %s191, 4
        %s193 = smul.addr %s189, 4
        %s194 = sadd.s32 %s192, %s193
        %s195 = smul.addr %s194, 4
        %s196 = scalar_lea.vmem %s0, %s195
        %s197 = smul.u32 3, %s22
        %v198 = vld [vmem:[%s196] sm:$0xff]
        %v199 = vld [vmem:[%s196 + $0x8] sm:$0xf]
        %v200 = vld [vmem:[%s1] sm:$0xff]
        %v201 = vld [vmem:[%s196] sm:$0xff]
        %v202 = vld [vmem:[%s196 + $0x8] sm:$0xff]
        %s203 = scalar_lea.vmem %s1, 8
        %v204 = vld [vmem:[%s203] sm:$0xff]
        %v207 = vcombine.high %v201, %v201
        %v208 = vcombine.high %v202, %v202
        %209 = vrot.lane.b32.xlu0 %v201, 127
        %v210 = vpop.permute.xlu0 %209
        %211 = vrot.lane.b32.xlu0 %v207, 127
        %v212 = vpop.permute.xlu0 %211
        %213 = vrot.lane.b32.xlu0 %v202, 127
        %v214 = vpop.permute.xlu0 %213
        %215 = vrot.lane.b32.xlu0 %v208, 127
        %v216 = vpop.permute.xlu0 %215
        %vm217 = vcmask 1039360
        %v218 = vsel %vm217, %v210, %v212
        %v219 = vsel %vm217, %v212, %v214
        %v220 = vsel %vm217, %v214, %v216
        %vm221 = vcmask 31744
        %v223 = vsel %vm221, %v204, 0
        %vm225 = vcmask 1043456
        %v226 = vsel %vm225, %v218, 0
        %v228 = vsel %vm225, %v219, 0
        %v230 = vsel %vm225, %v220, 0
        %232 = vmatprep.subr.mxu0 %v228
        %233 = vmatpush1.msra.mxu0 %v226
        %234 = vmatprep.subr.mxu0 0.0
        %235 = vmatpush1.msra.mxu0 0.0
        %236 = vmatprep.subr.mxu0 0.0
        %237 = vmatpush1.msra.mxu0 0.0
        %238 = vmatprep.subr.mxu0 0.0
        %239 = vmatpush1.msra.mxu0 0.0
        %240 = vmatprep.subr.mxu0 0.0
        %241 = vmatpush1.msra.mxu0 0.0
        %242 = vmatprep.subr.mxu0 0.0
        %243 = vmatpush1.msra.mxu0 0.0
        %244 = vmatprep.subr.mxu0 0.0
        %245 = vmatpush1.msra.mxu0 0.0
        %246 = vmatprep.subr.mxu0 0.0
        %247 = vmatpush1.msra.mxu0 0.0
        %248 = vmatprep.subr.mxu0 0.0
        %249 = vmatpush1.msra.mxu0 0.0
        %250 = vmatprep.subr.mxu0 0.0
        %251 = vmatpush1.msra.mxu0 0.0
        %252 = vmatprep.subr.mxu0 0.0
        %253 = vmatpush1.msra.mxu0 0.0
        %254 = vmatprep.subr.mxu0 0.0
        %255 = vmatpush1.msra.mxu0 0.0
        %256 = vmatprep.subr.mxu0 0.0
        %257 = vmatpush1.msra.mxu0 0.0
        %258 = vmatprep.subr.mxu0 0.0
        %259 = vmatpush1.msra.mxu0 0.0
        %260 = vmatprep.subr.mxu0 0.0
        %261 = vmatpush1.msra.mxu0 0.0
        %262 = vmatprep.subr.mxu0 0.0
        %263 = vmatpush1.msra.mxu0 0.0
        %264 = vmatprep.subr.mxu0 0.0
        %265 = vmatpush1.msra.mxu0 0.0
        %266 = vmatprep.subr.mxu0 0.0
        %267 = vmatpush1.msra.mxu0 0.0
        %268 = vmatprep.subr.mxu0 0.0
        %269 = vmatpush1.msra.mxu0 0.0
        %270 = vmatprep.subr.mxu0 0.0
        %271 = vmatpush1.msra.mxu0 0.0
        %272 = vmatprep.subr.mxu0 0.0
        %273 = vmatpush1.msra.mxu0 0.0
        %274 = vmatprep.subr.mxu0 0.0
        %275 = vmatpush1.msra.mxu0 0.0
        %276 = vmatprep.subr.mxu0 0.0
        %277 = vmatpush1.msra.mxu0 0.0
        %278 = vmatprep.subr.mxu0 0.0
        %279 = vmatpush1.msra.mxu0 0.0
        %280 = vmatprep.subr.mxu0 0.0
        %281 = vmatpush1.msra.mxu0 0.0
        %282 = vmatprep.subr.mxu0 0.0
        %283 = vmatpush1.msra.mxu0 0.0
        %284 = vmatprep.subr.mxu0 0.0
        %285 = vmatpush1.msra.mxu0 0.0
        %286 = vmatprep.subr.mxu0 0.0
        %287 = vmatpush1.msra.mxu0 0.0
        %288 = vmatprep.subr.mxu0 0.0
        %289 = vmatpush1.msra.mxu0 0.0
        %290 = vmatprep.subr.mxu0 0.0
        %291 = vmatpush1.msra.mxu0 0.0
        %292 = vmatprep.subr.mxu0 0.0
        %293 = vmatpush1.msra.mxu0 0.0
        %294 = vmatprep.subr.mxu0 0.0
        %295 = vmatpush1.msra.mxu0 0.0
        %296 = vmatprep.mubr.f32.mxu0 0.0
        %297 = vmatmul.mubr.f32.gmra.mrb[0].mxu0 %v223
        %v298 = vpop.f32.mrb[0].mxu0
        %v299 = vadd.f32 0.0, %v298
        %v300 = vpop.f32.mrb[0].mxu0
        %v301 = vadd.f32 0.0, %v300
        %302 = vdwg.mxu0
        %303 = vmatprep.subr.mxu0 0.0
        %304 = vmatpush1.msra.mxu0 %v230
        %305 = vmatprep.subr.mxu0 0.0
        %306 = vmatpush1.msra.mxu0 0.0
        %307 = vmatprep.subr.mxu0 0.0
        %308 = vmatpush1.msra.mxu0 0.0
        %309 = vmatprep.subr.mxu0 0.0
        %310 = vmatpush1.msra.mxu0 0.0
        %311 = vmatprep.subr.mxu0 0.0
        %312 = vmatpush1.msra.mxu0 0.0
        %313 = vmatprep.subr.mxu0 0.0
        %314 = vmatpush1.msra.mxu0 0.0
        %315 = vmatprep.subr.mxu0 0.0
        %316 = vmatpush1.msra.mxu0 0.0
        %317 = vmatprep.subr.mxu0 0.0
        %318 = vmatpush1.msra.mxu0 0.0
        %319 = vmatprep.subr.mxu0 0.0
        %320 = vmatpush1.msra.mxu0 0.0
        %321 = vmatprep.subr.mxu0 0.0
        %322 = vmatpush1.msra.mxu0 0.0
        %323 = vmatprep.subr.mxu0 0.0
        %324 = vmatpush1.msra.mxu0 0.0
        %325 = vmatprep.subr.mxu0 0.0
        %326 = vmatpush1.msra.mxu0 0.0
        %327 = vmatprep.subr.mxu0 0.0
        %328 = vmatpush1.msra.mxu0 0.0
        %329 = vmatprep.subr.mxu0 0.0
        %330 = vmatpush1.msra.mxu0 0.0
        %331 = vmatprep.subr.mxu0 0.0
        %332 = vmatpush1.msra.mxu0 0.0
        %333 = vmatprep.subr.mxu0 0.0
        %334 = vmatpush1.msra.mxu0 0.0
        %335 = vmatprep.subr.mxu0 0.0
        %336 = vmatpush1.msra.mxu0 0.0
        %337 = vmatprep.subr.mxu0 0.0
        %338 = vmatpush1.msra.mxu0 0.0
        %339 = vmatprep.subr.mxu0 0.0
        %340 = vmatpush1.msra.mxu0 0.0
        %341 = vmatprep.subr.mxu0 0.0
        %342 = vmatpush1.msra.mxu0 0.0
        %343 = vmatprep.subr.mxu0 0.0
        %344 = vmatpush1.msra.mxu0 0.0
        %345 = vmatprep.subr.mxu0 0.0
        %346 = vmatpush1.msra.mxu0 0.0
        %347 = vmatprep.subr.mxu0 0.0
        %348 = vmatpush1.msra.mxu0 0.0
        %349 = vmatprep.subr.mxu0 0.0
        %350 = vmatpush1.msra.mxu0 0.0
        %351 = vmatprep.subr.mxu0 0.0
        %352 = vmatpush1.msra.mxu0 0.0
        %353 = vmatprep.subr.mxu0 0.0
        %354 = vmatpush1.msra.mxu0 0.0
        %355 = vmatprep.subr.mxu0 0.0
        %356 = vmatpush1.msra.mxu0 0.0
        %357 = vmatprep.subr.mxu0 0.0
        %358 = vmatpush1.msra.mxu0 0.0
        %359 = vmatprep.subr.mxu0 0.0
        %360 = vmatpush1.msra.mxu0 0.0
        %361 = vmatprep.subr.mxu0 0.0
        %362 = vmatpush1.msra.mxu0 0.0
        %363 = vmatprep.subr.mxu0 0.0
        %364 = vmatpush1.msra.mxu0 0.0
        %365 = vmatprep.subr.mxu0 0.0
        %366 = vmatpush1.msra.mxu0 0.0
        %367 = vmatprep.mubr.f32.mxu0 0.0
        %368 = vmatmul.mubr.f32.gmra.mrb[0].mxu0 %v223
        %v369 = vpop.f32.mrb[0].mxu0
        %v370 = vadd.f32 0.0, %v369
        %v371 = vpop.f32.mrb[0].mxu0
        %372 = vdwg.mxu0
        %v375 = vcombine.high %v198, %v198
        %v377 = vsel %vm221, %v200, 0
        %v379 = vsel %vm225, %v198, 0
        %v381 = vsel %vm225, %v375, 0
        %v383 = vsel %vm225, %v199, 0
        %385 = vmatprep.subr.mxu0 %v381
        %386 = vmatpush1.msra.mxu0 %v379
        %387 = vmatprep.subr.mxu0 0.0
        %388 = vmatpush1.msra.mxu0 0.0
        %389 = vmatprep.subr.mxu0 0.0
        %390 = vmatpush1.msra.mxu0 0.0
        %391 = vmatprep.subr.mxu0 0.0
        %392 = vmatpush1.msra.mxu0 0.0
        %393 = vmatprep.subr.mxu0 0.0
        %394 = vmatpush1.msra.mxu0 0.0
        %395 = vmatprep.subr.mxu0 0.0
        %396 = vmatpush1.msra.mxu0 0.0
        %397 = vmatprep.subr.mxu0 0.0
        %398 = vmatpush1.msra.mxu0 0.0
        %399 = vmatprep.subr.mxu0 0.0
        %400 = vmatpush1.msra.mxu0 0.0
        %401 = vmatprep.subr.mxu0 0.0
        %402 = vmatpush1.msra.mxu0 0.0
        %403 = vmatprep.subr.mxu0 0.0
        %404 = vmatpush1.msra.mxu0 0.0
        %405 = vmatprep.subr.mxu0 0.0
        %406 = vmatpush1.msra.mxu0 0.0
        %407 = vmatprep.subr.mxu0 0.0
        %408 = vmatpush1.msra.mxu0 0.0
        %409 = vmatprep.subr.mxu0 0.0
        %410 = vmatpush1.msra.mxu0 0.0
        %411 = vmatprep.subr.mxu0 0.0
        %412 = vmatpush1.msra.mxu0 0.0
        %413 = vmatprep.subr.mxu0 0.0
        %414 = vmatpush1.msra.mxu0 0.0
        %415 = vmatprep.subr.mxu0 0.0
        %416 = vmatpush1.msra.mxu0 0.0
        %417 = vmatprep.subr.mxu0 0.0
        %418 = vmatpush1.msra.mxu0 0.0
        %419 = vmatprep.subr.mxu0 0.0
        %420 = vmatpush1.msra.mxu0 0.0
        %421 = vmatprep.subr.mxu0 0.0
        %422 = vmatpush1.msra.mxu0 0.0
        %423 = vmatprep.subr.mxu0 0.0
        %424 = vmatpush1.msra.mxu0 0.0
        %425 = vmatprep.subr.mxu0 0.0
        %426 = vmatpush1.msra.mxu0 0.0
        %427 = vmatprep.subr.mxu0 0.0
        %428 = vmatpush1.msra.mxu0 0.0
        %429 = vmatprep.subr.mxu0 0.0
        %430 = vmatpush1.msra.mxu0 0.0
        %431 = vmatprep.subr.mxu0 0.0
        %432 = vmatpush1.msra.mxu0 0.0
        %433 = vmatprep.subr.mxu0 0.0
        %434 = vmatpush1.msra.mxu0 0.0
        %435 = vmatprep.subr.mxu0 0.0
        %436 = vmatpush1.msra.mxu0 0.0
        %437 = vmatprep.subr.mxu0 0.0
        %438 = vmatpush1.msra.mxu0 0.0
        %439 = vmatprep.subr.mxu0 0.0
        %440 = vmatpush1.msra.mxu0 0.0
        %441 = vmatprep.subr.mxu0 0.0
        %442 = vmatpush1.msra.mxu0 0.0
        %443 = vmatprep.subr.mxu0 0.0
        %444 = vmatpush1.msra.mxu0 0.0
        %445 = vmatprep.subr.mxu0 0.0
        %446 = vmatpush1.msra.mxu0 0.0
        %447 = vmatprep.subr.mxu0 0.0
        %448 = vmatpush1.msra.mxu0 0.0
        %449 = vmatprep.mubr.f32.mxu0 0.0
        %450 = vmatmul.mubr.f32.gmra.mrb[0].mxu0 %v377
        %v451 = vpop.f32.mrb[0].mxu0
        %v452 = vadd.f32 %v299, %v451
        %v453 = vpop.f32.mrb[0].mxu0
        %v454 = vadd.f32 %v301, %v453
        %455 = vdwg.mxu0
        %456 = vmatprep.subr.mxu0 0.0
        %457 = vmatpush1.msra.mxu0 %v383
        %458 = vmatprep.subr.mxu0 0.0
        %459 = vmatpush1.msra.mxu0 0.0
        %460 = vmatprep.subr.mxu0 0.0
        %461 = vmatpush1.msra.mxu0 0.0
        %462 = vmatprep.subr.mxu0 0.0
        %463 = vmatpush1.msra.mxu0 0.0
        %464 = vmatprep.subr.mxu0 0.0
        %465 = vmatpush1.msra.mxu0 0.0
        %466 = vmatprep.subr.mxu0 0.0
        %467 = vmatpush1.msra.mxu0 0.0
        %468 = vmatprep.subr.mxu0 0.0
        %469 = vmatpush1.msra.mxu0 0.0
        %470 = vmatprep.subr.mxu0 0.0
        %471 = vmatpush1.msra.mxu0 0.0
        %472 = vmatprep.subr.mxu0 0.0
        %473 = vmatpush1.msra.mxu0 0.0
        %474 = vmatprep.subr.mxu0 0.0
        %475 = vmatpush1.msra.mxu0 0.0
        %476 = vmatprep.subr.mxu0 0.0
        %477 = vmatpush1.msra.mxu0 0.0
        %478 = vmatprep.subr.mxu0 0.0
        %479 = vmatpush1.msra.mxu0 0.0
        %480 = vmatprep.subr.mxu0 0.0
        %481 = vmatpush1.msra.mxu0 0.0
        %482 = vmatprep.subr.mxu0 0.0
        %483 = vmatpush1.msra.mxu0 0.0
        %484 = vmatprep.subr.mxu0 0.0
        %485 = vmatpush1.msra.mxu0 0.0
        %486 = vmatprep.subr.mxu0 0.0
        %487 = vmatpush1.msra.mxu0 0.0
        %488 = vmatprep.subr.mxu0 0.0
        %489 = vmatpush1.msra.mxu0 0.0
        %490 = vmatprep.subr.mxu0 0.0
        %491 = vmatpush1.msra.mxu0 0.0
        %492 = vmatprep.subr.mxu0 0.0
        %493 = vmatpush1.msra.mxu0 0.0
        %494 = vmatprep.subr.mxu0 0.0
        %495 = vmatpush1.msra.mxu0 0.0
        %496 = vmatprep.subr.mxu0 0.0
        %497 = vmatpush1.msra.mxu0 0.0
        %498 = vmatprep.subr.mxu0 0.0
        %499 = vmatpush1.msra.mxu0 0.0
        %500 = vmatprep.subr.mxu0 0.0
        %501 = vmatpush1.msra.mxu0 0.0
        %502 = vmatprep.subr.mxu0 0.0
        %503 = vmatpush1.msra.mxu0 0.0
        %504 = vmatprep.subr.mxu0 0.0
        %505 = vmatpush1.msra.mxu0 0.0
        %506 = vmatprep.subr.mxu0 0.0
        %507 = vmatpush1.msra.mxu0 0.0
        %508 = vmatprep.subr.mxu0 0.0
        %509 = vmatpush1.msra.mxu0 0.0
        %510 = vmatprep.subr.mxu0 0.0
        %511 = vmatpush1.msra.mxu0 0.0
        %512 = vmatprep.subr.mxu0 0.0
        %513 = vmatpush1.msra.mxu0 0.0
        %514 = vmatprep.subr.mxu0 0.0
        %515 = vmatpush1.msra.mxu0 0.0
        %516 = vmatprep.subr.mxu0 0.0
        %517 = vmatpush1.msra.mxu0 0.0
        %518 = vmatprep.subr.mxu0 0.0
        %519 = vmatpush1.msra.mxu0 0.0
        %520 = vmatprep.mubr.f32.mxu0 0.0
        %521 = vmatmul.mubr.f32.gmra.mrb[0].mxu0 %v377
        %v522 = vpop.f32.mrb[0].mxu0
        %v523 = vadd.f32 %v370, %v522
        %v524 = vpop.f32.mrb[0].mxu0
        %525 = vdwg.mxu0
        %v526 = vld [vmem:[%s196] sm:$0xff]
        %v527 = vld [vmem:[%s196 + $0x8] sm:$0xff]
        %s528 = scalar_lea.vmem %s1, 16
        %v529 = vld [vmem:[%s528] sm:$0xff]
        %v532 = vcombine.high %v526, %v526
        %v533 = vcombine.high %v527, %v527
        %534 = vrot.lane.b32.xlu0 %v526, 126
        %v535 = vpop.permute.xlu0 %534
        %536 = vrot.lane.b32.xlu0 %v532, 126
        %v537 = vpop.permute.xlu0 %536
        %538 = vrot.lane.b32.xlu0 %v527, 126
        %v539 = vpop.permute.xlu0 %538
        %540 = vrot.lane.b32.xlu0 %v533, 126
        %v541 = vpop.permute.xlu0 %540
        %vm542 = vcmask 1031168
        %v543 = vsel %vm542, %v535, %v537
        %v544 = vsel %vm542, %v537, %v539
        %v545 = vsel %vm542, %v539, %v541
        %v547 = vsel %vm221, %v529, 0
        %v549 = vsel %vm225, %v543, 0
        %v551 = vsel %vm225, %v544, 0
        %v553 = vsel %vm225, %v545, 0
        %555 = vmatprep.subr.mxu0 %v551
        %556 = vmatpush1.msra.mxu0 %v549
        %557 = vmatprep.subr.mxu0 0.0
        %558 = vmatpush1.msra.mxu0 0.0
        %559 = vmatprep.subr.mxu0 0.0
        %560 = vmatpush1.msra.mxu0 0.0
        %561 = vmatprep.subr.mxu0 0.0
        %562 = vmatpush1.msra.mxu0 0.0
        %563 = vmatprep.subr.mxu0 0.0
        %564 = vmatpush1.msra.mxu0 0.0
        %565 = vmatprep.subr.mxu0 0.0
        %566 = vmatpush1.msra.mxu0 0.0
        %567 = vmatprep.subr.mxu0 0.0
        %568 = vmatpush1.msra.mxu0 0.0
        %569 = vmatprep.subr.mxu0 0.0
        %570 = vmatpush1.msra.mxu0 0.0
        %571 = vmatprep.subr.mxu0 0.0
        %572 = vmatpush1.msra.mxu0 0.0
        %573 = vmatprep.subr.mxu0 0.0
        %574 = vmatpush1.msra.mxu0 0.0
        %575 = vmatprep.subr.mxu0 0.0
        %576 = vmatpush1.msra.mxu0 0.0
        %577 = vmatprep.subr.mxu0 0.0
        %578 = vmatpush1.msra.mxu0 0.0
        %579 = vmatprep.subr.mxu0 0.0
        %580 = vmatpush1.msra.mxu0 0.0
        %581 = vmatprep.subr.mxu0 0.0
        %582 = vmatpush1.msra.mxu0 0.0
        %583 = vmatprep.subr.mxu0 0.0
        %584 = vmatpush1.msra.mxu0 0.0
        %585 = vmatprep.subr.mxu0 0.0
        %586 = vmatpush1.msra.mxu0 0.0
        %587 = vmatprep.subr.mxu0 0.0
        %588 = vmatpush1.msra.mxu0 0.0
        %589 = vmatprep.subr.mxu0 0.0
        %590 = vmatpush1.msra.mxu0 0.0
        %591 = vmatprep.subr.mxu0 0.0
        %592 = vmatpush1.msra.mxu0 0.0
        %593 = vmatprep.subr.mxu0 0.0
        %594 = vmatpush1.msra.mxu0 0.0
        %595 = vmatprep.subr.mxu0 0.0
        %596 = vmatpush1.msra.mxu0 0.0
        %597 = vmatprep.subr.mxu0 0.0
        %598 = vmatpush1.msra.mxu0 0.0
        %599 = vmatprep.subr.mxu0 0.0
        %600 = vmatpush1.msra.mxu0 0.0
        %601 = vmatprep.subr.mxu0 0.0
        %602 = vmatpush1.msra.mxu0 0.0
        %603 = vmatprep.subr.mxu0 0.0
        %604 = vmatpush1.msra.mxu0 0.0
        %605 = vmatprep.subr.mxu0 0.0
        %606 = vmatpush1.msra.mxu0 0.0
        %607 = vmatprep.subr.mxu0 0.0
        %608 = vmatpush1.msra.mxu0 0.0
        %609 = vmatprep.subr.mxu0 0.0
        %610 = vmatpush1.msra.mxu0 0.0
        %611 = vmatprep.subr.mxu0 0.0
        %612 = vmatpush1.msra.mxu0 0.0
        %613 = vmatprep.subr.mxu0 0.0
        %614 = vmatpush1.msra.mxu0 0.0
        %615 = vmatprep.subr.mxu0 0.0
        %616 = vmatpush1.msra.mxu0 0.0
        %617 = vmatprep.subr.mxu0 0.0
        %618 = vmatpush1.msra.mxu0 0.0
        %619 = vmatprep.mubr.f32.mxu0 0.0
        %620 = vmatmul.mubr.f32.gmra.mrb[0].mxu0 %v547
        %v621 = vpop.f32.mrb[0].mxu0
        %v622 = vadd.f32 0.0, %v621
        %v623 = vpop.f32.mrb[0].mxu0
        %v624 = vadd.f32 0.0, %v623
        %625 = vdwg.mxu0
        %626 = vmatprep.subr.mxu0 0.0
        %627 = vmatpush1.msra.mxu0 %v553
        %628 = vmatprep.subr.mxu0 0.0
        %629 = vmatpush1.msra.mxu0 0.0
        %630 = vmatprep.subr.mxu0 0.0
        %631 = vmatpush1.msra.mxu0 0.0
        %632 = vmatprep.subr.mxu0 0.0
        %633 = vmatpush1.msra.mxu0 0.0
        %634 = vmatprep.subr.mxu0 0.0
        %635 = vmatpush1.msra.mxu0 0.0
        %636 = vmatprep.subr.mxu0 0.0
        %637 = vmatpush1.msra.mxu0 0.0
        %638 = vmatprep.subr.mxu0 0.0
        %639 = vmatpush1.msra.mxu0 0.0
        %640 = vmatprep.subr.mxu0 0.0
        %641 = vmatpush1.msra.mxu0 0.0
        %642 = vmatprep.subr.mxu0 0.0
        %643 = vmatpush1.msra.mxu0 0.0
        %644 = vmatprep.subr.mxu0 0.0
        %645 = vmatpush1.msra.mxu0 0.0
        %646 = vmatprep.subr.mxu0 0.0
        %647 = vmatpush1.msra.mxu0 0.0
        %648 = vmatprep.subr.mxu0 0.0
        %649 = vmatpush1.msra.mxu0 0.0
        %650 = vmatprep.subr.mxu0 0.0
        %651 = vmatpush1.msra.mxu0 0.0
        %652 = vmatprep.subr.mxu0 0.0
        %653 = vmatpush1.msra.mxu0 0.0
        %654 = vmatprep.subr.mxu0 0.0
        %655 = vmatpush1.msra.mxu0 0.0
        %656 = vmatprep.subr.mxu0 0.0
        %657 = vmatpush1.msra.mxu0 0.0
        %658 = vmatprep.subr.mxu0 0.0
        %659 = vmatpush1.msra.mxu0 0.0
        %660 = vmatprep.subr.mxu0 0.0
        %661 = vmatpush1.msra.mxu0 0.0
        %662 = vmatprep.subr.mxu0 0.0
        %663 = vmatpush1.msra.mxu0 0.0
        %664 = vmatprep.subr.mxu0 0.0
        %665 = vmatpush1.msra.mxu0 0.0
        %666 = vmatprep.subr.mxu0 0.0
        %667 = vmatpush1.msra.mxu0 0.0
        %668 = vmatprep.subr.mxu0 0.0
        %669 = vmatpush1.msra.mxu0 0.0
        %670 = vmatprep.subr.mxu0 0.0
        %671 = vmatpush1.msra.mxu0 0.0
        %672 = vmatprep.subr.mxu0 0.0
        %673 = vmatpush1.msra.mxu0 0.0
        %674 = vmatprep.subr.mxu0 0.0
        %675 = vmatpush1.msra.mxu0 0.0
        %676 = vmatprep.subr.mxu0 0.0
        %677 = vmatpush1.msra.mxu0 0.0
        %678 = vmatprep.subr.mxu0 0.0
        %679 = vmatpush1.msra.mxu0 0.0
        %680 = vmatprep.subr.mxu0 0.0
        %681 = vmatpush1.msra.mxu0 0.0
        %682 = vmatprep.subr.mxu0 0.0
        %683 = vmatpush1.msra.mxu0 0.0
        %684 = vmatprep.subr.mxu0 0.0
        %685 = vmatpush1.msra.mxu0 0.0
        %686 = vmatprep.subr.mxu0 0.0
        %687 = vmatpush1.msra.mxu0 0.0
        %688 = vmatprep.subr.mxu0 0.0
        %689 = vmatpush1.msra.mxu0 0.0
        %690 = vmatprep.mubr.f32.mxu0 0.0
        %691 = vmatmul.mubr.f32.gmra.mrb[0].mxu0 %v547
        %v692 = vpop.f32.mrb[0].mxu0
        %v693 = vadd.f32 0.0, %v692
        %v694 = vpop.f32.mrb[0].mxu0
        %695 = vdwg.mxu0
        %v696 = vadd.f32 %v452, %v622
        %v697 = vadd.f32 %v454, %v624
        %v698 = vadd.f32 %v523, %v693
        %v699 = vld [vmem:[%s196] sm:$0xff]
        %v700 = vld [vmem:[%s196 + $0x8] sm:$0xff]
        %s701 = scalar_lea.vmem %s1, 24
        %v702 = vld [vmem:[%s701] sm:$0xff]
        %v705 = vcombine.high %v699, %v699
        %v706 = vcombine.high %v700, %v700
        %707 = vrot.lane.b32.xlu0 %v699, 110
        %v708 = vpop.permute.xlu0 %707
        %709 = vrot.lane.b32.xlu0 %v705, 110
        %v710 = vpop.permute.xlu0 %709
        %711 = vrot.lane.b32.xlu0 %v700, 110
        %v712 = vpop.permute.xlu0 %711
        %713 = vrot.lane.b32.xlu0 %v706, 110
        %v714 = vpop.permute.xlu0 %713
        %vm715 = vcmask 900096
        %v716 = vsel %vm715, %v708, %v710
        %v717 = vsel %vm715, %v710, %v712
        %v718 = vsel %vm715, %v712, %v714
        %v720 = vsel %vm221, %v702, 0
        %v722 = vsel %vm225, %v716, 0
        %v724 = vsel %vm225, %v717, 0
        %v726 = vsel %vm225, %v718, 0
        %728 = vmatprep.subr.mxu0 %v724
        %729 = vmatpush1.msra.mxu0 %v722
        %730 = vmatprep.subr.mxu0 0.0
        %731 = vmatpush1.msra.mxu0 0.0
        %732 = vmatprep.subr.mxu0 0.0
        %733 = vmatpush1.msra.mxu0 0.0
        %734 = vmatprep.subr.mxu0 0.0
        %735 = vmatpush1.msra.mxu0 0.0
        %736 = vmatprep.subr.mxu0 0.0
        %737 = vmatpush1.msra.mxu0 0.0
        %738 = vmatprep.subr.mxu0 0.0
        %739 = vmatpush1.msra.mxu0 0.0
        %740 = vmatprep.subr.mxu0 0.0
        %741 = vmatpush1.msra.mxu0 0.0
        %742 = vmatprep.subr.mxu0 0.0
        %743 = vmatpush1.msra.mxu0 0.0
        %744 = vmatprep.subr.mxu0 0.0
        %745 = vmatpush1.msra.mxu0 0.0
        %746 = vmatprep.subr.mxu0 0.0
        %747 = vmatpush1.msra.mxu0 0.0
        %748 = vmatprep.subr.mxu0 0.0
        %749 = vmatpush1.msra.mxu0 0.0
        %750 = vmatprep.subr.mxu0 0.0
        %751 = vmatpush1.msra.mxu0 0.0
        %752 = vmatprep.subr.mxu0 0.0
        %753 = vmatpush1.msra.mxu0 0.0
        %754 = vmatprep.subr.mxu0 0.0
        %755 = vmatpush1.msra.mxu0 0.0
        %756 = vmatprep.subr.mxu0 0.0
        %757 = vmatpush1.msra.mxu0 0.0
        %758 = vmatprep.subr.mxu0 0.0
        %759 = vmatpush1.msra.mxu0 0.0
        %760 = vmatprep.subr.mxu0 0.0
        %761 = vmatpush1.msra.mxu0 0.0
        %762 = vmatprep.subr.mxu0 0.0
        %763 = vmatpush1.msra.mxu0 0.0
        %764 = vmatprep.subr.mxu0 0.0
        %765 = vmatpush1.msra.mxu0 0.0
        %766 = vmatprep.subr.mxu0 0.0
        %767 = vmatpush1.msra.mxu0 0.0
        %768 = vmatprep.subr.mxu0 0.0
        %769 = vmatpush1.msra.mxu0 0.0
        %770 = vmatprep.subr.mxu0 0.0
        %771 = vmatpush1.msra.mxu0 0.0
        %772 = vmatprep.subr.mxu0 0.0
        %773 = vmatpush1.msra.mxu0 0.0
        %774 = vmatprep.subr.mxu0 0.0
        %775 = vmatpush1.msra.mxu0 0.0
        %776 = vmatprep.subr.mxu0 0.0
        %777 = vmatpush1.msra.mxu0 0.0
        %778 = vmatprep.subr.mxu0 0.0
        %779 = vmatpush1.msra.mxu0 0.0
        %780 = vmatprep.subr.mxu0 0.0
        %781 = vmatpush1.msra.mxu0 0.0
        %782 = vmatprep.subr.mxu0 0.0
        %783 = vmatpush1.msra.mxu0 0.0
        %784 = vmatprep.subr.mxu0 0.0
        %785 = vmatpush1.msra.mxu0 0.0
        %786 = vmatprep.subr.mxu0 0.0
        %787 = vmatpush1.msra.mxu0 0.0
        %788 = vmatprep.subr.mxu0 0.0
        %789 = vmatpush1.msra.mxu0 0.0
        %790 = vmatprep.subr.mxu0 0.0
        %791 = vmatpush1.msra.mxu0 0.0
        %792 = vmatprep.mubr.f32.mxu0 0.0
        %793 = vmatmul.mubr.f32.gmra.mrb[0].mxu0 %v720
        %v794 = vpop.f32.mrb[0].mxu0
        %v795 = vadd.f32 0.0, %v794
        %v796 = vpop.f32.mrb[0].mxu0
        %v797 = vadd.f32 0.0, %v796
        %798 = vdwg.mxu0
        %799 = vmatprep.subr.mxu0 0.0
        %800 = vmatpush1.msra.mxu0 %v726
        %801 = vmatprep.subr.mxu0 0.0
        %802 = vmatpush1.msra.mxu0 0.0
        %803 = vmatprep.subr.mxu0 0.0
        %804 = vmatpush1.msra.mxu0 0.0
        %805 = vmatprep.subr.mxu0 0.0
        %806 = vmatpush1.msra.mxu0 0.0
        %807 = vmatprep.subr.mxu0 0.0
        %808 = vmatpush1.msra.mxu0 0.0
        %809 = vmatprep.subr.mxu0 0.0
        %810 = vmatpush1.msra.mxu0 0.0
        %811 = vmatprep.subr.mxu0 0.0
        %812 = vmatpush1.msra.mxu0 0.0
        %813 = vmatprep.subr.mxu0 0.0
        %814 = vmatpush1.msra.mxu0 0.0
        %815 = vmatprep.subr.mxu0 0.0
        %816 = vmatpush1.msra.mxu0 0.0
        %817 = vmatprep.subr.mxu0 0.0
        %818 = vmatpush1.msra.mxu0 0.0
        %819 = vmatprep.subr.mxu0 0.0
        %820 = vmatpush1.msra.mxu0 0.0
        %821 = vmatprep.subr.mxu0 0.0
        %822 = vmatpush1.msra.mxu0 0.0
        %823 = vmatprep.subr.mxu0 0.0
        %824 = vmatpush1.msra.mxu0 0.0
        %825 = vmatprep.subr.mxu0 0.0
        %826 = vmatpush1.msra.mxu0 0.0
        %827 = vmatprep.subr.mxu0 0.0
        %828 = vmatpush1.msra.mxu0 0.0
        %829 = vmatprep.subr.mxu0 0.0
        %830 = vmatpush1.msra.mxu0 0.0
        %831 = vmatprep.subr.mxu0 0.0
        %832 = vmatpush1.msra.mxu0 0.0
        %833 = vmatprep.subr.mxu0 0.0
        %834 = vmatpush1.msra.mxu0 0.0
        %835 = vmatprep.subr.mxu0 0.0
        %836 = vmatpush1.msra.mxu0 0.0
        %837 = vmatprep.subr.mxu0 0.0
        %838 = vmatpush1.msra.mxu0 0.0
        %839 = vmatprep.subr.mxu0 0.0
        %840 = vmatpush1.msra.mxu0 0.0
        %841 = vmatprep.subr.mxu0 0.0
        %842 = vmatpush1.msra.mxu0 0.0
        %843 = vmatprep.subr.mxu0 0.0
        %844 = vmatpush1.msra.mxu0 0.0
        %845 = vmatprep.subr.mxu0 0.0
        %846 = vmatpush1.msra.mxu0 0.0
        %847 = vmatprep.subr.mxu0 0.0
        %848 = vmatpush1.msra.mxu0 0.0
        %849 = vmatprep.subr.mxu0 0.0
        %850 = vmatpush1.msra.mxu0 0.0
        %851 = vmatprep.subr.mxu0 0.0
        %852 = vmatpush1.msra.mxu0 0.0
        %853 = vmatprep.subr.mxu0 0.0
        %854 = vmatpush1.msra.mxu0 0.0
        %855 = vmatprep.subr.mxu0 0.0
        %856 = vmatpush1.msra.mxu0 0.0
        %857 = vmatprep.subr.mxu0 0.0
        %858 = vmatpush1.msra.mxu0 0.0
        %859 = vmatprep.subr.mxu0 0.0
        %860 = vmatpush1.msra.mxu0 0.0
        %861 = vmatprep.subr.mxu0 0.0
        %862 = vmatpush1.msra.mxu0 0.0
        %863 = vmatprep.mubr.f32.mxu0 0.0
        %864 = vmatmul.mubr.f32.gmra.mrb[0].mxu0 %v720
        %v865 = vpop.f32.mrb[0].mxu0
        %v866 = vadd.f32 0.0, %v865
        %v867 = vpop.f32.mrb[0].mxu0
        %868 = vdwg.mxu0
        %v869 = vadd.f32 %v696, %v795
        %v870 = vadd.f32 %v697, %v797
        %v871 = vadd.f32 %v698, %v866
        %v872 = vld [vmem:[%s196] sm:$0xff]
        %v873 = vld [vmem:[%s196 + $0x8] sm:$0xff]
        %s874 = scalar_lea.vmem %s1, 32
        %v875 = vld [vmem:[%s874] sm:$0xff]
        %v878 = vcombine.high %v872, %v872
        %v879 = vcombine.high %v873, %v873
        %880 = vrot.lane.b32.xlu0 %v872, 109
        %v881 = vpop.permute.xlu0 %880
        %882 = vrot.lane.b32.xlu0 %v878, 109
        %v883 = vpop.permute.xlu0 %882
        %884 = vrot.lane.b32.xlu0 %v873, 109
        %v885 = vpop.permute.xlu0 %884
        %886 = vrot.lane.b32.xlu0 %v879, 109
        %v887 = vpop.permute.xlu0 %886
        %vm888 = vcmask 891904
        %v889 = vsel %vm888, %v881, %v883
        %v890 = vsel %vm888, %v883, %v885
        %v891 = vsel %vm888, %v885, %v887
        %v893 = vsel %vm221, %v875, 0
        %v895 = vsel %vm225, %v889, 0
        %v897 = vsel %vm225, %v890, 0
        %v899 = vsel %vm225, %v891, 0
        %901 = vmatprep.subr.mxu0 %v897
        %902 = vmatpush1.msra.mxu0 %v895
        %903 = vmatprep.subr.mxu0 0.0
        %904 = vmatpush1.msra.mxu0 0.0
        %905 = vmatprep.subr.mxu0 0.0
        %906 = vmatpush1.msra.mxu0 0.0
        %907 = vmatprep.subr.mxu0 0.0
        %908 = vmatpush1.msra.mxu0 0.0
        %909 = vmatprep.subr.mxu0 0.0
        %910 = vmatpush1.msra.mxu0 0.0
        %911 = vmatprep.subr.mxu0 0.0
        %912 = vmatpush1.msra.mxu0 0.0
        %913 = vmatprep.subr.mxu0 0.0
        %914 = vmatpush1.msra.mxu0 0.0
        %915 = vmatprep.subr.mxu0 0.0
        %916 = vmatpush1.msra.mxu0 0.0
        %917 = vmatprep.subr.mxu0 0.0
        %918 = vmatpush1.msra.mxu0 0.0
        %919 = vmatprep.subr.mxu0 0.0
        %920 = vmatpush1.msra.mxu0 0.0
        %921 = vmatprep.subr.mxu0 0.0
        %922 = vmatpush1.msra.mxu0 0.0
        %923 = vmatprep.subr.mxu0 0.0
        %924 = vmatpush1.msra.mxu0 0.0
        %925 = vmatprep.subr.mxu0 0.0
        %926 = vmatpush1.msra.mxu0 0.0
        %927 = vmatprep.subr.mxu0 0.0
        %928 = vmatpush1.msra.mxu0 0.0
        %929 = vmatprep.subr.mxu0 0.0
        %930 = vmatpush1.msra.mxu0 0.0
        %931 = vmatprep.subr.mxu0 0.0
        %932 = vmatpush1.msra.mxu0 0.0
        %933 = vmatprep.subr.mxu0 0.0
        %934 = vmatpush1.msra.mxu0 0.0
        %935 = vmatprep.subr.mxu0 0.0
        %936 = vmatpush1.msra.mxu0 0.0
        %937 = vmatprep.subr.mxu0 0.0
        %938 = vmatpush1.msra.mxu0 0.0
        %939 = vmatprep.subr.mxu0 0.0
        %940 = vmatpush1.msra.mxu0 0.0
        %941 = vmatprep.subr.mxu0 0.0
        %942 = vmatpush1.msra.mxu0 0.0
        %943 = vmatprep.subr.mxu0 0.0
        %944 = vmatpush1.msra.mxu0 0.0
        %945 = vmatprep.subr.mxu0 0.0
        %946 = vmatpush1.msra.mxu0 0.0
        %947 = vmatprep.subr.mxu0 0.0
        %948 = vmatpush1.msra.mxu0 0.0
        %949 = vmatprep.subr.mxu0 0.0
        %950 = vmatpush1.msra.mxu0 0.0
        %951 = vmatprep.subr.mxu0 0.0
        %952 = vmatpush1.msra.mxu0 0.0
        %953 = vmatprep.subr.mxu0 0.0
        %954 = vmatpush1.msra.mxu0 0.0
        %955 = vmatprep.subr.mxu0 0.0
        %956 = vmatpush1.msra.mxu0 0.0
        %957 = vmatprep.subr.mxu0 0.0
        %958 = vmatpush1.msra.mxu0 0.0
        %959 = vmatprep.subr.mxu0 0.0
        %960 = vmatpush1.msra.mxu0 0.0
        %961 = vmatprep.subr.mxu0 0.0
        %962 = vmatpush1.msra.mxu0 0.0
        %963 = vmatprep.subr.mxu0 0.0
        %964 = vmatpush1.msra.mxu0 0.0
        %965 = vmatprep.mubr.f32.mxu0 0.0
        %966 = vmatmul.mubr.f32.gmra.mrb[0].mxu0 %v893
        %v967 = vpop.f32.mrb[0].mxu0
        %v968 = vadd.f32 0.0, %v967
        %v969 = vpop.f32.mrb[0].mxu0
        %v970 = vadd.f32 0.0, %v969
        %971 = vdwg.mxu0
        %972 = vmatprep.subr.mxu0 0.0
        %973 = vmatpush1.msra.mxu0 %v899
        %974 = vmatprep.subr.mxu0 0.0
        %975 = vmatpush1.msra.mxu0 0.0
        %976 = vmatprep.subr.mxu0 0.0
        %977 = vmatpush1.msra.mxu0 0.0
        %978 = vmatprep.subr.mxu0 0.0
        %979 = vmatpush1.msra.mxu0 0.0
        %980 = vmatprep.subr.mxu0 0.0
        %981 = vmatpush1.msra.mxu0 0.0
        %982 = vmatprep.subr.mxu0 0.0
        %983 = vmatpush1.msra.mxu0 0.0
        %984 = vmatprep.subr.mxu0 0.0
        %985 = vmatpush1.msra.mxu0 0.0
        %986 = vmatprep.subr.mxu0 0.0
        %987 = vmatpush1.msra.mxu0 0.0
        %988 = vmatprep.subr.mxu0 0.0
        %989 = vmatpush1.msra.mxu0 0.0
        %990 = vmatprep.subr.mxu0 0.0
        %991 = vmatpush1.msra.mxu0 0.0
        %992 = vmatprep.subr.mxu0 0.0
        %993 = vmatpush1.msra.mxu0 0.0
        %994 = vmatprep.subr.mxu0 0.0
        %995 = vmatpush1.msra.mxu0 0.0
        %996 = vmatprep.subr.mxu0 0.0
        %997 = vmatpush1.msra.mxu0 0.0
        %998 = vmatprep.subr.mxu0 0.0
        %999 = vmatpush1.msra.mxu0 0.0
        %1000 = vmatprep.subr.mxu0 0.0
        %1001 = vmatpush1.msra.mxu0 0.0
        %1002 = vmatprep.subr.mxu0 0.0
        %1003 = vmatpush1.msra.mxu0 0.0
        %1004 = vmatprep.subr.mxu0 0.0
        %1005 = vmatpush1.msra.mxu0 0.0
        %1006 = vmatprep.subr.mxu0 0.0
        %1007 = vmatpush1.msra.mxu0 0.0
        %1008 = vmatprep.subr.mxu0 0.0
        %1009 = vmatpush1.msra.mxu0 0.0
        %1010 = vmatprep.subr.mxu0 0.0
        %1011 = vmatpush1.msra.mxu0 0.0
        %1012 = vmatprep.subr.mxu0 0.0
        %1013 = vmatpush1.msra.mxu0 0.0
        %1014 = vmatprep.subr.mxu0 0.0
        %1015 = vmatpush1.msra.mxu0 0.0
        %1016 = vmatprep.subr.mxu0 0.0
        %1017 = vmatpush1.msra.mxu0 0.0
        %1018 = vmatprep.subr.mxu0 0.0
        %1019 = vmatpush1.msra.mxu0 0.0
        %1020 = vmatprep.subr.mxu0 0.0
        %1021 = vmatpush1.msra.mxu0 0.0
        %1022 = vmatprep.subr.mxu0 0.0
        %1023 = vmatpush1.msra.mxu0 0.0
        %1024 = vmatprep.subr.mxu0 0.0
        %1025 = vmatpush1.msra.mxu0 0.0
        %1026 = vmatprep.subr.mxu0 0.0
        %1027 = vmatpush1.msra.mxu0 0.0
        %1028 = vmatprep.subr.mxu0 0.0
        %1029 = vmatpush1.msra.mxu0 0.0
        %1030 = vmatprep.subr.mxu0 0.0
        %1031 = vmatpush1.msra.mxu0 0.0
        %1032 = vmatprep.subr.mxu0 0.0
        %1033 = vmatpush1.msra.mxu0 0.0
        %1034 = vmatprep.subr.mxu0 0.0
        %1035 = vmatpush1.msra.mxu0 0.0
        %1036 = vmatprep.mubr.f32.mxu0 0.0
        %1037 = vmatmul.mubr.f32.gmra.mrb[0].mxu0 %v893
        %v1038 = vpop.f32.mrb[0].mxu0
        %v1039 = vadd.f32 0.0, %v1038
        %v1040 = vpop.f32.mrb[0].mxu0
        %1041 = vdwg.mxu0
        %v1042 = vadd.f32 %v869, %v968
        %v1043 = vadd.f32 %v870, %v970
        %v1044 = vadd.f32 %v871, %v1039
        %v1045 = vld [vmem:[%s196] sm:$0xff]
        %v1046 = vld [vmem:[%s196 + $0x8] sm:$0xff]
        %s1047 = scalar_lea.vmem %s1, 40
        %v1048 = vld [vmem:[%s1047] sm:$0xff]
        %v1051 = vcombine.high %v1045, %v1045
        %v1052 = vcombine.high %v1046, %v1046
        %1053 = vrot.lane.b32.xlu0 %v1045, 108
        %v1054 = vpop.permute.xlu0 %1053
        %1055 = vrot.lane.b32.xlu0 %v1051, 108
        %v1056 = vpop.permute.xlu0 %1055
        %1057 = vrot.lane.b32.xlu0 %v1046, 108
        %v1058 = vpop.permute.xlu0 %1057
        %1059 = vrot.lane.b32.xlu0 %v1052, 108
        %v1060 = vpop.permute.xlu0 %1059
        %vm1061 = vcmask 883712
        %v1062 = vsel %vm1061, %v1054, %v1056
        %v1063 = vsel %vm1061, %v1056, %v1058
        %v1064 = vsel %vm1061, %v1058, %v1060
        %v1066 = vsel %vm221, %v1048, 0
        %v1068 = vsel %vm225, %v1062, 0
        %v1070 = vsel %vm225, %v1063, 0
        %v1072 = vsel %vm225, %v1064, 0
        %1074 = vmatprep.subr.mxu0 %v1070
        %1075 = vmatpush1.msra.mxu0 %v1068
        %1076 = vmatprep.subr.mxu0 0.0
        %1077 = vmatpush1.msra.mxu0 0.0
        %1078 = vmatprep.subr.mxu0 0.0
        %1079 = vmatpush1.msra.mxu0 0.0
        %1080 = vmatprep.subr.mxu0 0.0
        %1081 = vmatpush1.msra.mxu0 0.0
        %1082 = vmatprep.subr.mxu0 0.0
        %1083 = vmatpush1.msra.mxu0 0.0
        %1084 = vmatprep.subr.mxu0 0.0
        %1085 = vmatpush1.msra.mxu0 0.0
        %1086 = vmatprep.subr.mxu0 0.0
        %1087 = vmatpush1.msra.mxu0 0.0
        %1088 = vmatprep.subr.mxu0 0.0
        %1089 = vmatpush1.msra.mxu0 0.0
        %1090 = vmatprep.subr.mxu0 0.0
        %1091 = vmatpush1.msra.mxu0 0.0
        %1092 = vmatprep.subr.mxu0 0.0
        %1093 = vmatpush1.msra.mxu0 0.0
        %1094 = vmatprep.subr.mxu0 0.0
        %1095 = vmatpush1.msra.mxu0 0.0
        %1096 = vmatprep.subr.mxu0 0.0
        %1097 = vmatpush1.msra.mxu0 0.0
        %1098 = vmatprep.subr.mxu0 0.0
        %1099 = vmatpush1.msra.mxu0 0.0
        %1100 = vmatprep.subr.mxu0 0.0
        %1101 = vmatpush1.msra.mxu0 0.0
        %1102 = vmatprep.subr.mxu0 0.0
        %1103 = vmatpush1.msra.mxu0 0.0
        %1104 = vmatprep.subr.mxu0 0.0
        %1105 = vmatpush1.msra.mxu0 0.0
        %1106 = vmatprep.subr.mxu0 0.0
        %1107 = vmatpush1.msra.mxu0 0.0
        %1108 = vmatprep.subr.mxu0 0.0
        %1109 = vmatpush1.msra.mxu0 0.0
        %1110 = vmatprep.subr.mxu0 0.0
        %1111 = vmatpush1.msra.mxu0 0.0
        %1112 = vmatprep.subr.mxu0 0.0
        %1113 = vmatpush1.msra.mxu0 0.0
        %1114 = vmatprep.subr.mxu0 0.0
        %1115 = vmatpush1.msra.mxu0 0.0
        %1116 = vmatprep.subr.mxu0 0.0
        %1117 = vmatpush1.msra.mxu0 0.0
        %1118 = vmatprep.subr.mxu0 0.0
        %1119 = vmatpush1.msra.mxu0 0.0
        %1120 = vmatprep.subr.mxu0 0.0
        %1121 = vmatpush1.msra.mxu0 0.0
        %1122 = vmatprep.subr.mxu0 0.0
        %1123 = vmatpush1.msra.mxu0 0.0
        %1124 = vmatprep.subr.mxu0 0.0
        %1125 = vmatpush1.msra.mxu0 0.0
        %1126 = vmatprep.subr.mxu0 0.0
        %1127 = vmatpush1.msra.mxu0 0.0
        %1128 = vmatprep.subr.mxu0 0.0
        %1129 = vmatpush1.msra.mxu0 0.0
        %1130 = vmatprep.subr.mxu0 0.0
        %1131 = vmatpush1.msra.mxu0 0.0
        %1132 = vmatprep.subr.mxu0 0.0
        %1133 = vmatpush1.msra.mxu0 0.0
        %1134 = vmatprep.subr.mxu0 0.0
        %1135 = vmatpush1.msra.mxu0 0.0
        %1136 = vmatprep.subr.mxu0 0.0
        %1137 = vmatpush1.msra.mxu0 0.0
        %1138 = vmatprep.mubr.f32.mxu0 0.0
        %1139 = vmatmul.mubr.f32.gmra.mrb[0].mxu0 %v1066
        %v1140 = vpop.f32.mrb[0].mxu0
        %v1141 = vadd.f32 0.0, %v1140
        %v1142 = vpop.f32.mrb[0].mxu0
        %v1143 = vadd.f32 0.0, %v1142
        %1144 = vdwg.mxu0
        %1145 = vmatprep.subr.mxu0 0.0
        %1146 = vmatpush1.msra.mxu0 %v1072
        %1147 = vmatprep.subr.mxu0 0.0
        %1148 = vmatpush1.msra.mxu0 0.0
        %1149 = vmatprep.subr.mxu0 0.0
        %1150 = vmatpush1.msra.mxu0 0.0
        %1151 = vmatprep.subr.mxu0 0.0
        %1152 = vmatpush1.msra.mxu0 0.0
        %1153 = vmatprep.subr.mxu0 0.0
        %1154 = vmatpush1.msra.mxu0 0.0
        %1155 = vmatprep.subr.mxu0 0.0
        %1156 = vmatpush1.msra.mxu0 0.0
        %1157 = vmatprep.subr.mxu0 0.0
        %1158 = vmatpush1.msra.mxu0 0.0
        %1159 = vmatprep.subr.mxu0 0.0
        %1160 = vmatpush1.msra.mxu0 0.0
        %1161 = vmatprep.subr.mxu0 0.0
        %1162 = vmatpush1.msra.mxu0 0.0
        %1163 = vmatprep.subr.mxu0 0.0
        %1164 = vmatpush1.msra.mxu0 0.0
        %1165 = vmatprep.subr.mxu0 0.0
        %1166 = vmatpush1.msra.mxu0 0.0
        %1167 = vmatprep.subr.mxu0 0.0
        %1168 = vmatpush1.msra.mxu0 0.0
        %1169 = vmatprep.subr.mxu0 0.0
        %1170 = vmatpush1.msra.mxu0 0.0
        %1171 = vmatprep.subr.mxu0 0.0
        %1172 = vmatpush1.msra.mxu0 0.0
        %1173 = vmatprep.subr.mxu0 0.0
        %1174 = vmatpush1.msra.mxu0 0.0
        %1175 = vmatprep.subr.mxu0 0.0
        %1176 = vmatpush1.msra.mxu0 0.0
        %1177 = vmatprep.subr.mxu0 0.0
        %1178 = vmatpush1.msra.mxu0 0.0
        %1179 = vmatprep.subr.mxu0 0.0
        %1180 = vmatpush1.msra.mxu0 0.0
        %1181 = vmatprep.subr.mxu0 0.0
        %1182 = vmatpush1.msra.mxu0 0.0
        %1183 = vmatprep.subr.mxu0 0.0
        %1184 = vmatpush1.msra.mxu0 0.0
        %1185 = vmatprep.subr.mxu0 0.0
        %1186 = vmatpush1.msra.mxu0 0.0
        %1187 = vmatprep.subr.mxu0 0.0
        %1188 = vmatpush1.msra.mxu0 0.0
        %1189 = vmatprep.subr.mxu0 0.0
        %1190 = vmatpush1.msra.mxu0 0.0
        %1191 = vmatprep.subr.mxu0 0.0
        %1192 = vmatpush1.msra.mxu0 0.0
        %1193 = vmatprep.subr.mxu0 0.0
        %1194 = vmatpush1.msra.mxu0 0.0
        %1195 = vmatprep.subr.mxu0 0.0
        %1196 = vmatpush1.msra.mxu0 0.0
        %1197 = vmatprep.subr.mxu0 0.0
        %1198 = vmatpush1.msra.mxu0 0.0
        %1199 = vmatprep.subr.mxu0 0.0
        %1200 = vmatpush1.msra.mxu0 0.0
        %1201 = vmatprep.subr.mxu0 0.0
        %1202 = vmatpush1.msra.mxu0 0.0
        %1203 = vmatprep.subr.mxu0 0.0
        %1204 = vmatpush1.msra.mxu0 0.0
        %1205 = vmatprep.subr.mxu0 0.0
        %1206 = vmatpush1.msra.mxu0 0.0
        %1207 = vmatprep.subr.mxu0 0.0
        %1208 = vmatpush1.msra.mxu0 0.0
        %1209 = vmatprep.mubr.f32.mxu0 0.0
        %1210 = vmatmul.mubr.f32.gmra.mrb[0].mxu0 %v1066
        %v1211 = vpop.f32.mrb[0].mxu0
        %v1212 = vadd.f32 0.0, %v1211
        %v1213 = vpop.f32.mrb[0].mxu0
        %1214 = vdwg.mxu0
        %v1215 = vadd.f32 %v1042, %v1141
        %v1216 = vadd.f32 %v1043, %v1143
        %v1217 = vadd.f32 %v1044, %v1212
        %v1218 = vld [vmem:[%s196] sm:$0xff]
        %v1219 = vld [vmem:[%s196 + $0x8] sm:$0xff]
        %s1220 = scalar_lea.vmem %s1, 48
        %v1221 = vld [vmem:[%s1220] sm:$0xff]
        %v1224 = vcombine.high %v1218, %v1218
        %v1225 = vcombine.high %v1219, %v1219
        %1226 = vrot.lane.b32.xlu0 %v1218, 92
        %v1227 = vpop.permute.xlu0 %1226
        %1228 = vrot.lane.b32.xlu0 %v1224, 92
        %v1229 = vpop.permute.xlu0 %1228
        %1230 = vrot.lane.b32.xlu0 %v1219, 92
        %v1231 = vpop.permute.xlu0 %1230
        %1232 = vrot.lane.b32.xlu0 %v1225, 92
        %v1233 = vpop.permute.xlu0 %1232
        %vm1234 = vcmask 752640
        %v1235 = vsel %vm1234, %v1227, %v1229
        %v1236 = vsel %vm1234, %v1229, %v1231
        %v1237 = vsel %vm1234, %v1231, %v1233
        %v1239 = vsel %vm221, %v1221, 0
        %v1241 = vsel %vm225, %v1235, 0
        %v1243 = vsel %vm225, %v1236, 0
        %v1245 = vsel %vm225, %v1237, 0
        %1247 = vmatprep.subr.mxu0 %v1243
        %1248 = vmatpush1.msra.mxu0 %v1241
        %1249 = vmatprep.subr.mxu0 0.0
        %1250 = vmatpush1.msra.mxu0 0.0
        %1251 = vmatprep.subr.mxu0 0.0
        %1252 = vmatpush1.msra.mxu0 0.0
        %1253 = vmatprep.subr.mxu0 0.0
        %1254 = vmatpush1.msra.mxu0 0.0
        %1255 = vmatprep.subr.mxu0 0.0
        %1256 = vmatpush1.msra.mxu0 0.0
        %1257 = vmatprep.subr.mxu0 0.0
        %1258 = vmatpush1.msra.mxu0 0.0
        %1259 = vmatprep.subr.mxu0 0.0
        %1260 = vmatpush1.msra.mxu0 0.0
        %1261 = vmatprep.subr.mxu0 0.0
        %1262 = vmatpush1.msra.mxu0 0.0
        %1263 = vmatprep.subr.mxu0 0.0
        %1264 = vmatpush1.msra.mxu0 0.0
        %1265 = vmatprep.subr.mxu0 0.0
        %1266 = vmatpush1.msra.mxu0 0.0
        %1267 = vmatprep.subr.mxu0 0.0
        %1268 = vmatpush1.msra.mxu0 0.0
        %1269 = vmatprep.subr.mxu0 0.0
        %1270 = vmatpush1.msra.mxu0 0.0
        %1271 = vmatprep.subr.mxu0 0.0
        %1272 = vmatpush1.msra.mxu0 0.0
        %1273 = vmatprep.subr.mxu0 0.0
        %1274 = vmatpush1.msra.mxu0 0.0
        %1275 = vmatprep.subr.mxu0 0.0
        %1276 = vmatpush1.msra.mxu0 0.0
        %1277 = vmatprep.subr.mxu0 0.0
        %1278 = vmatpush1.msra.mxu0 0.0
        %1279 = vmatprep.subr.mxu0 0.0
        %1280 = vmatpush1.msra.mxu0 0.0
        %1281 = vmatprep.subr.mxu0 0.0
        %1282 = vmatpush1.msra.mxu0 0.0
        %1283 = vmatprep.subr.mxu0 0.0
        %1284 = vmatpush1.msra.mxu0 0.0
        %1285 = vmatprep.subr.mxu0 0.0
        %1286 = vmatpush1.msra.mxu0 0.0
        %1287 = vmatprep.subr.mxu0 0.0
        %1288 = vmatpush1.msra.mxu0 0.0
        %1289 = vmatprep.subr.mxu0 0.0
        %1290 = vmatpush1.msra.mxu0 0.0
        %1291 = vmatprep.subr.mxu0 0.0
        %1292 = vmatpush1.msra.mxu0 0.0
        %1293 = vmatprep.subr.mxu0 0.0
        %1294 = vmatpush1.msra.mxu0 0.0
        %1295 = vmatprep.subr.mxu0 0.0
        %1296 = vmatpush1.msra.mxu0 0.0
        %1297 = vmatprep.subr.mxu0 0.0
        %1298 = vmatpush1.msra.mxu0 0.0
        %1299 = vmatprep.subr.mxu0 0.0
        %1300 = vmatpush1.msra.mxu0 0.0
        %1301 = vmatprep.subr.mxu0 0.0
        %1302 = vmatpush1.msra.mxu0 0.0
        %1303 = vmatprep.subr.mxu0 0.0
        %1304 = vmatpush1.msra.mxu0 0.0
        %1305 = vmatprep.subr.mxu0 0.0
        %1306 = vmatpush1.msra.mxu0 0.0
        %1307 = vmatprep.subr.mxu0 0.0
        %1308 = vmatpush1.msra.mxu0 0.0
        %1309 = vmatprep.subr.mxu0 0.0
        %1310 = vmatpush1.msra.mxu0 0.0
        %1311 = vmatprep.mubr.f32.mxu0 0.0
        %1312 = vmatmul.mubr.f32.gmra.mrb[0].mxu0 %v1239
        %v1313 = vpop.f32.mrb[0].mxu0
        %v1314 = vadd.f32 0.0, %v1313
        %v1315 = vpop.f32.mrb[0].mxu0
        %v1316 = vadd.f32 0.0, %v1315
        %1317 = vdwg.mxu0
        %1318 = vmatprep.subr.mxu0 0.0
        %1319 = vmatpush1.msra.mxu0 %v1245
        %1320 = vmatprep.subr.mxu0 0.0
        %1321 = vmatpush1.msra.mxu0 0.0
        %1322 = vmatprep.subr.mxu0 0.0
        %1323 = vmatpush1.msra.mxu0 0.0
        %1324 = vmatprep.subr.mxu0 0.0
        %1325 = vmatpush1.msra.mxu0 0.0
        %1326 = vmatprep.subr.mxu0 0.0
        %1327 = vmatpush1.msra.mxu0 0.0
        %1328 = vmatprep.subr.mxu0 0.0
        %1329 = vmatpush1.msra.mxu0 0.0
        %1330 = vmatprep.subr.mxu0 0.0
        %1331 = vmatpush1.msra.mxu0 0.0
        %1332 = vmatprep.subr.mxu0 0.0
        %1333 = vmatpush1.msra.mxu0 0.0
        %1334 = vmatprep.subr.mxu0 0.0
        %1335 = vmatpush1.msra.mxu0 0.0
        %1336 = vmatprep.subr.mxu0 0.0
        %1337 = vmatpush1.msra.mxu0 0.0
        %1338 = vmatprep.subr.mxu0 0.0
        %1339 = vmatpush1.msra.mxu0 0.0
        %1340 = vmatprep.subr.mxu0 0.0
        %1341 = vmatpush1.msra.mxu0 0.0
        %1342 = vmatprep.subr.mxu0 0.0
        %1343 = vmatpush1.msra.mxu0 0.0
        %1344 = vmatprep.subr.mxu0 0.0
        %1345 = vmatpush1.msra.mxu0 0.0
        %1346 = vmatprep.subr.mxu0 0.0
        %1347 = vmatpush1.msra.mxu0 0.0
        %1348 = vmatprep.subr.mxu0 0.0
        %1349 = vmatpush1.msra.mxu0 0.0
        %1350 = vmatprep.subr.mxu0 0.0
        %1351 = vmatpush1.msra.mxu0 0.0
        %1352 = vmatprep.subr.mxu0 0.0
        %1353 = vmatpush1.msra.mxu0 0.0
        %1354 = vmatprep.subr.mxu0 0.0
        %1355 = vmatpush1.msra.mxu0 0.0
        %1356 = vmatprep.subr.mxu0 0.0
        %1357 = vmatpush1.msra.mxu0 0.0
        %1358 = vmatprep.subr.mxu0 0.0
        %1359 = vmatpush1.msra.mxu0 0.0
        %1360 = vmatprep.subr.mxu0 0.0
        %1361 = vmatpush1.msra.mxu0 0.0
        %1362 = vmatprep.subr.mxu0 0.0
        %1363 = vmatpush1.msra.mxu0 0.0
        %1364 = vmatprep.subr.mxu0 0.0
        %1365 = vmatpush1.msra.mxu0 0.0
        %1366 = vmatprep.subr.mxu0 0.0
        %1367 = vmatpush1.msra.mxu0 0.0
        %1368 = vmatprep.subr.mxu0 0.0
        %1369 = vmatpush1.msra.mxu0 0.0
        %1370 = vmatprep.subr.mxu0 0.0
        %1371 = vmatpush1.msra.mxu0 0.0
        %1372 = vmatprep.subr.mxu0 0.0
        %1373 = vmatpush1.msra.mxu0 0.0
        %1374 = vmatprep.subr.mxu0 0.0
        %1375 = vmatpush1.msra.mxu0 0.0
        %1376 = vmatprep.subr.mxu0 0.0
        %1377 = vmatpush1.msra.mxu0 0.0
        %1378 = vmatprep.subr.mxu0 0.0
        %1379 = vmatpush1.msra.mxu0 0.0
        %1380 = vmatprep.subr.mxu0 0.0
        %1381 = vmatpush1.msra.mxu0 0.0
        %1382 = vmatprep.mubr.f32.mxu0 0.0
        %1383 = vmatmul.mubr.f32.gmra.mrb[0].mxu0 %v1239
        %v1384 = vpop.f32.mrb[0].mxu0
        %v1385 = vadd.f32 0.0, %v1384
        %v1386 = vpop.f32.mrb[0].mxu0
        %1387 = vdwg.mxu0
        %v1388 = vadd.f32 %v1215, %v1314
        %v1389 = vadd.f32 %v1216, %v1316
        %v1390 = vadd.f32 %v1217, %v1385
        %v1391 = vld [vmem:[%s196] sm:$0xff]
        %v1392 = vld [vmem:[%s196 + $0x8] sm:$0xff]
        %s1393 = scalar_lea.vmem %s1, 56
        %v1394 = vld [vmem:[%s1393] sm:$0xff]
        %v1397 = vcombine.high %v1391, %v1391
        %v1398 = vcombine.high %v1392, %v1392
        %1399 = vrot.lane.b32.xlu0 %v1391, 91
        %v1400 = vpop.permute.xlu0 %1399
        %1401 = vrot.lane.b32.xlu0 %v1397, 91
        %v1402 = vpop.permute.xlu0 %1401
        %1403 = vrot.lane.b32.xlu0 %v1392, 91
        %v1404 = vpop.permute.xlu0 %1403
        %1405 = vrot.lane.b32.xlu0 %v1398, 91
        %v1406 = vpop.permute.xlu0 %1405
        %vm1407 = vcmask 744448
        %v1408 = vsel %vm1407, %v1400, %v1402
        %v1409 = vsel %vm1407, %v1402, %v1404
        %v1410 = vsel %vm1407, %v1404, %v1406
        %v1412 = vsel %vm221, %v1394, 0
        %v1414 = vsel %vm225, %v1408, 0
        %v1416 = vsel %vm225, %v1409, 0
        %v1418 = vsel %vm225, %v1410, 0
        %1420 = vmatprep.subr.mxu0 %v1416
        %1421 = vmatpush1.msra.mxu0 %v1414
        %1422 = vmatprep.subr.mxu0 0.0
        %1423 = vmatpush1.msra.mxu0 0.0
        %1424 = vmatprep.subr.mxu0 0.0
        %1425 = vmatpush1.msra.mxu0 0.0
        %1426 = vmatprep.subr.mxu0 0.0
        %1427 = vmatpush1.msra.mxu0 0.0
        %1428 = vmatprep.subr.mxu0 0.0
        %1429 = vmatpush1.msra.mxu0 0.0
        %1430 = vmatprep.subr.mxu0 0.0
        %1431 = vmatpush1.msra.mxu0 0.0
        %1432 = vmatprep.subr.mxu0 0.0
        %1433 = vmatpush1.msra.mxu0 0.0
        %1434 = vmatprep.subr.mxu0 0.0
        %1435 = vmatpush1.msra.mxu0 0.0
        %1436 = vmatprep.subr.mxu0 0.0
        %1437 = vmatpush1.msra.mxu0 0.0
        %1438 = vmatprep.subr.mxu0 0.0
        %1439 = vmatpush1.msra.mxu0 0.0
        %1440 = vmatprep.subr.mxu0 0.0
        %1441 = vmatpush1.msra.mxu0 0.0
        %1442 = vmatprep.subr.mxu0 0.0
        %1443 = vmatpush1.msra.mxu0 0.0
        %1444 = vmatprep.subr.mxu0 0.0
        %1445 = vmatpush1.msra.mxu0 0.0
        %1446 = vmatprep.subr.mxu0 0.0
        %1447 = vmatpush1.msra.mxu0 0.0
        %1448 = vmatprep.subr.mxu0 0.0
        %1449 = vmatpush1.msra.mxu0 0.0
        %1450 = vmatprep.subr.mxu0 0.0
        %1451 = vmatpush1.msra.mxu0 0.0
        %1452 = vmatprep.subr.mxu0 0.0
        %1453 = vmatpush1.msra.mxu0 0.0
        %1454 = vmatprep.subr.mxu0 0.0
        %1455 = vmatpush1.msra.mxu0 0.0
        %1456 = vmatprep.subr.mxu0 0.0
        %1457 = vmatpush1.msra.mxu0 0.0
        %1458 = vmatprep.subr.mxu0 0.0
        %1459 = vmatpush1.msra.mxu0 0.0
        %1460 = vmatprep.subr.mxu0 0.0
        %1461 = vmatpush1.msra.mxu0 0.0
        %1462 = vmatprep.subr.mxu0 0.0
        %1463 = vmatpush1.msra.mxu0 0.0
        %1464 = vmatprep.subr.mxu0 0.0
        %1465 = vmatpush1.msra.mxu0 0.0
        %1466 = vmatprep.subr.mxu0 0.0
        %1467 = vmatpush1.msra.mxu0 0.0
        %1468 = vmatprep.subr.mxu0 0.0
        %1469 = vmatpush1.msra.mxu0 0.0
        %1470 = vmatprep.subr.mxu0 0.0
        %1471 = vmatpush1.msra.mxu0 0.0
        %1472 = vmatprep.subr.mxu0 0.0
        %1473 = vmatpush1.msra.mxu0 0.0
        %1474 = vmatprep.subr.mxu0 0.0
        %1475 = vmatpush1.msra.mxu0 0.0
        %1476 = vmatprep.subr.mxu0 0.0
        %1477 = vmatpush1.msra.mxu0 0.0
        %1478 = vmatprep.subr.mxu0 0.0
        %1479 = vmatpush1.msra.mxu0 0.0
        %1480 = vmatprep.subr.mxu0 0.0
        %1481 = vmatpush1.msra.mxu0 0.0
        %1482 = vmatprep.subr.mxu0 0.0
        %1483 = vmatpush1.msra.mxu0 0.0
        %1484 = vmatprep.mubr.f32.mxu0 0.0
        %1485 = vmatmul.mubr.f32.gmra.mrb[0].mxu0 %v1412
        %v1486 = vpop.f32.mrb[0].mxu0
        %v1487 = vadd.f32 0.0, %v1486
        %v1488 = vpop.f32.mrb[0].mxu0
        %v1489 = vadd.f32 0.0, %v1488
        %1490 = vdwg.mxu0
        %1491 = vmatprep.subr.mxu0 0.0
        %1492 = vmatpush1.msra.mxu0 %v1418
        %1493 = vmatprep.subr.mxu0 0.0
        %1494 = vmatpush1.msra.mxu0 0.0
        %1495 = vmatprep.subr.mxu0 0.0
        %1496 = vmatpush1.msra.mxu0 0.0
        %1497 = vmatprep.subr.mxu0 0.0
        %1498 = vmatpush1.msra.mxu0 0.0
        %1499 = vmatprep.subr.mxu0 0.0
        %1500 = vmatpush1.msra.mxu0 0.0
        %1501 = vmatprep.subr.mxu0 0.0
        %1502 = vmatpush1.msra.mxu0 0.0
        %1503 = vmatprep.subr.mxu0 0.0
        %1504 = vmatpush1.msra.mxu0 0.0
        %1505 = vmatprep.subr.mxu0 0.0
        %1506 = vmatpush1.msra.mxu0 0.0
        %1507 = vmatprep.subr.mxu0 0.0
        %1508 = vmatpush1.msra.mxu0 0.0
        %1509 = vmatprep.subr.mxu0 0.0
        %1510 = vmatpush1.msra.mxu0 0.0
        %1511 = vmatprep.subr.mxu0 0.0
        %1512 = vmatpush1.msra.mxu0 0.0
        %1513 = vmatprep.subr.mxu0 0.0
        %1514 = vmatpush1.msra.mxu0 0.0
        %1515 = vmatprep.subr.mxu0 0.0
        %1516 = vmatpush1.msra.mxu0 0.0
        %1517 = vmatprep.subr.mxu0 0.0
        %1518 = vmatpush1.msra.mxu0 0.0
        %1519 = vmatprep.subr.mxu0 0.0
        %1520 = vmatpush1.msra.mxu0 0.0
        %1521 = vmatprep.subr.mxu0 0.0
        %1522 = vmatpush1.msra.mxu0 0.0
        %1523 = vmatprep.subr.mxu0 0.0
        %1524 = vmatpush1.msra.mxu0 0.0
        %1525 = vmatprep.subr.mxu0 0.0
        %1526 = vmatpush1.msra.mxu0 0.0
        %1527 = vmatprep.subr.mxu0 0.0
        %1528 = vmatpush1.msra.mxu0 0.0
        %1529 = vmatprep.subr.mxu0 0.0
        %1530 = vmatpush1.msra.mxu0 0.0
        %1531 = vmatprep.subr.mxu0 0.0
        %1532 = vmatpush1.msra.mxu0 0.0
        %1533 = vmatprep.subr.mxu0 0.0
        %1534 = vmatpush1.msra.mxu0 0.0
        %1535 = vmatprep.subr.mxu0 0.0
        %1536 = vmatpush1.msra.mxu0 0.0
        %1537 = vmatprep.subr.mxu0 0.0
        %1538 = vmatpush1.msra.mxu0 0.0
        %1539 = vmatprep.subr.mxu0 0.0
        %1540 = vmatpush1.msra.mxu0 0.0
        %1541 = vmatprep.subr.mxu0 0.0
        %1542 = vmatpush1.msra.mxu0 0.0
        %1543 = vmatprep.subr.mxu0 0.0
        %1544 = vmatpush1.msra.mxu0 0.0
        %1545 = vmatprep.subr.mxu0 0.0
        %1546 = vmatpush1.msra.mxu0 0.0
        %1547 = vmatprep.subr.mxu0 0.0
        %1548 = vmatpush1.msra.mxu0 0.0
        %1549 = vmatprep.subr.mxu0 0.0
        %1550 = vmatpush1.msra.mxu0 0.0
        %1551 = vmatprep.subr.mxu0 0.0
        %1552 = vmatpush1.msra.mxu0 0.0
        %1553 = vmatprep.subr.mxu0 0.0
        %1554 = vmatpush1.msra.mxu0 0.0
        %1555 = vmatprep.mubr.f32.mxu0 0.0
        %1556 = vmatmul.mubr.f32.gmra.mrb[0].mxu0 %v1412
        %v1557 = vpop.f32.mrb[0].mxu0
        %v1558 = vadd.f32 0.0, %v1557
        %v1559 = vpop.f32.mrb[0].mxu0
        %1560 = vdwg.mxu0
        %v1561 = vadd.f32 %v1388, %v1487
        %v1562 = vadd.f32 %v1389, %v1489
        %v1563 = vadd.f32 %v1390, %v1558
        %v1564 = vld [vmem:[%s196] sm:$0xff]
        %v1565 = vld [vmem:[%s196 + $0x8] sm:$0xff]
        %s1566 = scalar_lea.vmem %s1, 64
        %v1567 = vld [vmem:[%s1566] sm:$0xff]
        %v1570 = vcombine.high %v1564, %v1564
        %v1571 = vcombine.high %v1565, %v1565
        %1572 = vrot.lane.b32.xlu0 %v1564, 90
        %v1573 = vpop.permute.xlu0 %1572
        %1574 = vrot.lane.b32.xlu0 %v1570, 90
        %v1575 = vpop.permute.xlu0 %1574
        %1576 = vrot.lane.b32.xlu0 %v1565, 90
        %v1577 = vpop.permute.xlu0 %1576
        %1578 = vrot.lane.b32.xlu0 %v1571, 90
        %v1579 = vpop.permute.xlu0 %1578
        %vm1580 = vcmask 736256
        %v1581 = vsel %vm1580, %v1573, %v1575
        %v1582 = vsel %vm1580, %v1575, %v1577
        %v1583 = vsel %vm1580, %v1577, %v1579
        %v1585 = vsel %vm221, %v1567, 0
        %v1587 = vsel %vm225, %v1581, 0
        %v1589 = vsel %vm225, %v1582, 0
        %v1591 = vsel %vm225, %v1583, 0
        %1593 = vmatprep.subr.mxu0 %v1589
        %1594 = vmatpush1.msra.mxu0 %v1587
        %1595 = vmatprep.subr.mxu0 0.0
        %1596 = vmatpush1.msra.mxu0 0.0
        %1597 = vmatprep.subr.mxu0 0.0
        %1598 = vmatpush1.msra.mxu0 0.0
        %1599 = vmatprep.subr.mxu0 0.0
        %1600 = vmatpush1.msra.mxu0 0.0
        %1601 = vmatprep.subr.mxu0 0.0
        %1602 = vmatpush1.msra.mxu0 0.0
        %1603 = vmatprep.subr.mxu0 0.0
        %1604 = vmatpush1.msra.mxu0 0.0
        %1605 = vmatprep.subr.mxu0 0.0
        %1606 = vmatpush1.msra.mxu0 0.0
        %1607 = vmatprep.subr.mxu0 0.0
        %1608 = vmatpush1.msra.mxu0 0.0
        %1609 = vmatprep.subr.mxu0 0.0
        %1610 = vmatpush1.msra.mxu0 0.0
        %1611 = vmatprep.subr.mxu0 0.0
        %1612 = vmatpush1.msra.mxu0 0.0
        %1613 = vmatprep.subr.mxu0 0.0
        %1614 = vmatpush1.msra.mxu0 0.0
        %1615 = vmatprep.subr.mxu0 0.0
        %1616 = vmatpush1.msra.mxu0 0.0
        %1617 = vmatprep.subr.mxu0 0.0
        %1618 = vmatpush1.msra.mxu0 0.0
        %1619 = vmatprep.subr.mxu0 0.0
        %1620 = vmatpush1.msra.mxu0 0.0
        %1621 = vmatprep.subr.mxu0 0.0
        %1622 = vmatpush1.msra.mxu0 0.0
        %1623 = vmatprep.subr.mxu0 0.0
        %1624 = vmatpush1.msra.mxu0 0.0
        %1625 = vmatprep.subr.mxu0 0.0
        %1626 = vmatpush1.msra.mxu0 0.0
        %1627 = vmatprep.subr.mxu0 0.0
        %1628 = vmatpush1.msra.mxu0 0.0
        %1629 = vmatprep.subr.mxu0 0.0
        %1630 = vmatpush1.msra.mxu0 0.0
        %1631 = vmatprep.subr.mxu0 0.0
        %1632 = vmatpush1.msra.mxu0 0.0
        %1633 = vmatprep.subr.mxu0 0.0
        %1634 = vmatpush1.msra.mxu0 0.0
        %1635 = vmatprep.subr.mxu0 0.0
        %1636 = vmatpush1.msra.mxu0 0.0
        %1637 = vmatprep.subr.mxu0 0.0
        %1638 = vmatpush1.msra.mxu0 0.0
        %1639 = vmatprep.subr.mxu0 0.0
        %1640 = vmatpush1.msra.mxu0 0.0
        %1641 = vmatprep.subr.mxu0 0.0
        %1642 = vmatpush1.msra.mxu0 0.0
        %1643 = vmatprep.subr.mxu0 0.0
        %1644 = vmatpush1.msra.mxu0 0.0
        %1645 = vmatprep.subr.mxu0 0.0
        %1646 = vmatpush1.msra.mxu0 0.0
        %1647 = vmatprep.subr.mxu0 0.0
        %1648 = vmatpush1.msra.mxu0 0.0
        %1649 = vmatprep.subr.mxu0 0.0
        %1650 = vmatpush1.msra.mxu0 0.0
        %1651 = vmatprep.subr.mxu0 0.0
        %1652 = vmatpush1.msra.mxu0 0.0
        %1653 = vmatprep.subr.mxu0 0.0
        %1654 = vmatpush1.msra.mxu0 0.0
        %1655 = vmatprep.subr.mxu0 0.0
        %1656 = vmatpush1.msra.mxu0 0.0
        %1657 = vmatprep.mubr.f32.mxu0 0.0
        %1658 = vmatmul.mubr.f32.gmra.mrb[0].mxu0 %v1585
        %v1659 = vpop.f32.mrb[0].mxu0
        %v1660 = vadd.f32 0.0, %v1659
        %v1661 = vpop.f32.mrb[0].mxu0
        %v1662 = vadd.f32 0.0, %v1661
        %1663 = vdwg.mxu0
        %1664 = vmatprep.subr.mxu0 0.0
        %1665 = vmatpush1.msra.mxu0 %v1591
        %1666 = vmatprep.subr.mxu0 0.0
        %1667 = vmatpush1.msra.mxu0 0.0
        %1668 = vmatprep.subr.mxu0 0.0
        %1669 = vmatpush1.msra.mxu0 0.0
        %1670 = vmatprep.subr.mxu0 0.0
        %1671 = vmatpush1.msra.mxu0 0.0
        %1672 = vmatprep.subr.mxu0 0.0
        %1673 = vmatpush1.msra.mxu0 0.0
        %1674 = vmatprep.subr.mxu0 0.0
        %1675 = vmatpush1.msra.mxu0 0.0
        %1676 = vmatprep.subr.mxu0 0.0
        %1677 = vmatpush1.msra.mxu0 0.0
        %1678 = vmatprep.subr.mxu0 0.0
        %1679 = vmatpush1.msra.mxu0 0.0
        %1680 = vmatprep.subr.mxu0 0.0
        %1681 = vmatpush1.msra.mxu0 0.0
        %1682 = vmatprep.subr.mxu0 0.0
        %1683 = vmatpush1.msra.mxu0 0.0
        %1684 = vmatprep.subr.mxu0 0.0
        %1685 = vmatpush1.msra.mxu0 0.0
        %1686 = vmatprep.subr.mxu0 0.0
        %1687 = vmatpush1.msra.mxu0 0.0
        %1688 = vmatprep.subr.mxu0 0.0
        %1689 = vmatpush1.msra.mxu0 0.0
        %1690 = vmatprep.subr.mxu0 0.0
        %1691 = vmatpush1.msra.mxu0 0.0
        %1692 = vmatprep.subr.mxu0 0.0
        %1693 = vmatpush1.msra.mxu0 0.0
        %1694 = vmatprep.subr.mxu0 0.0
        %1695 = vmatpush1.msra.mxu0 0.0
        %1696 = vmatprep.subr.mxu0 0.0
        %1697 = vmatpush1.msra.mxu0 0.0
        %1698 = vmatprep.subr.mxu0 0.0
        %1699 = vmatpush1.msra.mxu0 0.0
        %1700 = vmatprep.subr.mxu0 0.0
        %1701 = vmatpush1.msra.mxu0 0.0
        %1702 = vmatprep.subr.mxu0 0.0
        %1703 = vmatpush1.msra.mxu0 0.0
        %1704 = vmatprep.subr.mxu0 0.0
        %1705 = vmatpush1.msra.mxu0 0.0
        %1706 = vmatprep.subr.mxu0 0.0
        %1707 = vmatpush1.msra.mxu0 0.0
        %1708 = vmatprep.subr.mxu0 0.0
        %1709 = vmatpush1.msra.mxu0 0.0
        %1710 = vmatprep.subr.mxu0 0.0
        %1711 = vmatpush1.msra.mxu0 0.0
        %1712 = vmatprep.subr.mxu0 0.0
        %1713 = vmatpush1.msra.mxu0 0.0
        %1714 = vmatprep.subr.mxu0 0.0
        %1715 = vmatpush1.msra.mxu0 0.0
        %1716 = vmatprep.subr.mxu0 0.0
        %1717 = vmatpush1.msra.mxu0 0.0
        %1718 = vmatprep.subr.mxu0 0.0
        %1719 = vmatpush1.msra.mxu0 0.0
        %1720 = vmatprep.subr.mxu0 0.0
        %1721 = vmatpush1.msra.mxu0 0.0
        %1722 = vmatprep.subr.mxu0 0.0
        %1723 = vmatpush1.msra.mxu0 0.0
        %1724 = vmatprep.subr.mxu0 0.0
        %1725 = vmatpush1.msra.mxu0 0.0
        %1726 = vmatprep.subr.mxu0 0.0
        %1727 = vmatpush1.msra.mxu0 0.0
        %1728 = vmatprep.mubr.f32.mxu0 0.0
        %1729 = vmatmul.mubr.f32.gmra.mrb[0].mxu0 %v1585
        %v1730 = vpop.f32.mrb[0].mxu0
        %v1731 = vadd.f32 0.0, %v1730
        %v1732 = vpop.f32.mrb[0].mxu0
        %1733 = vdwg.mxu0
        %v1734 = vadd.f32 %v1561, %v1660
        %v1735 = vadd.f32 %v1562, %v1662
        %v1736 = vadd.f32 %v1563, %v1731
        %v1737 = vld [vmem:[%s2] sm:$0xff]
        %1739 = vset.pattern.permute.xlu0 0
        %1740 = vperm.xlu0 %1739, %v1737
        %v1741 = vpop.permute.xlu0 %1740
        %v1743 = vadd.f32 %v1734, %v1741
        %v1744 = vadd.f32 %v1735, %v1741
        %v1745 = vadd.f32 %v1736, %v1741
        %1746 = vst [vmem:[%s187] sm:$0xff] %v1743
        %1747 = vst [vmem:[%s187 + $0x8] sm:$0xff] %v1744
        %1748 = vst [vmem:[%s187 + $0x10] sm:$0xff] %v1745
        %s1749 = sand.u32 %s109, 1
        %s1750 = scalar_lea.sflag [#allocation3], %s1749
        %s1751 = sand.u32 %s109, 1
        %s1752 = smul.addr %s1751, 24
        %s1753 = scalar_lea.vmem [#allocation2], %s1752
        // Predicated region
        $region33: #{tpu_custom_call.1} parent=31 // pred_check
          %p1754 = pneg %p119
        $region34: #{tpu_custom_call.1} parent=31 // pred_check_branch
          %1756 = sbr.rel (%p1754) target = $region36
        $region35: #{tpu_custom_call.1} parent=31 // pred_region
          %s1757 = smul.u32 3, %s22
          %s1759 = ssub.s32 384, 384
          %1760 = vsyncadd %s1750, %s1759
          %s1761 = smul.addr %s21, 3
          %s1762 = sadd.s32 %s1757, %s1761
          %s1763 = smul.addr %s1762, 128
          %s1764 = scalar_lea.hbm %s3, %s1763
          %s1766 = sshll.u32 %s1753, 4
          %s1767 = int_to_ptr.vmem [resolvable:$true] %s1766
          %1769 = dma.vmem_to_hbm [thread:$0]  %s1767, 384, %s1764, %s1750
        $region36: #{tpu_custom_call.1} parent=31 // pred_fallthru
          _
      $region32: #{tpu_custom_call.1} parent=5 // pred_fallthru
        _
      %p1770 = scmp.le.s32.totalorder 2, %s12
      // Predicated region
      $region37: #{tpu_custom_call.1} parent=5 // pred_check
        %p1771 = pneg %p1770
      $region38: #{tpu_custom_call.1} parent=5 // pred_check_branch
        %1773 = sbr.rel (%p1771) target = $region40
      $region39: #{tpu_custom_call.1} parent=5 // pred_region
        %s1774 = ssub.s32 %s12, 2
        // Predicated region
        $region41: #{tpu_custom_call.1} parent=39 // pred_check
          %p1775 = pneg %p125
        $region42: #{tpu_custom_call.1} parent=39 // pred_check_branch
          %1777 = sbr.rel (%p1775) target = $region44
        $region43: #{tpu_custom_call.1} parent=39 // pred_region
          %s1778 = sand.u32 %s110, 1
          %s1779 = scalar_lea.sflag [#allocation3], %s1778
          %s1780 = sand.u32 %s110, 1
          %s1781 = smul.addr %s1780, 24
          %s1782 = scalar_lea.vmem [#allocation2], %s1781
          %1783 = dma.done %s1779, 384
        $region44: #{tpu_custom_call.1} parent=39 // pred_fallthru
          _
      $region40: #{tpu_custom_call.1} parent=5 // pred_fallthru
        _
    $region6: #{tpu_custom_call.1} parent=1 // loop_footer
      %s16 = sadd.s32 1, %s12
    $region7: #{tpu_custom_call.1} parent=1 // loop_footer_branch
      %11 = sbr.rel target = $region3
    $region8: #{tpu_custom_call.1} parent=1 // loop_exit
      _
    %1784 = vsyncpa [#allocation3], 1
    %s1785 = scalar_lea.sflag [#allocation3], 1
    %1786 = vsyncpa %s1785, 1

</llo_original>
